<compile_context>
chip_gen: v7x
topology: tpu7x:2x2x1
jax: 0.10.0
libtpu: 0.0.40
codegen_flags: <defaults>
</compile_context>

<pallas_src>
import numpy as np
import jax
import jax.numpy as jnp
from jax import lax
from jax.experimental import pallas as pl
from jax.experimental.pallas import tpu as pltpu

IGNORE_INDEX = 255
THRESH = 0.6
MIN_KEPT = 200000
FACTOR = 8
LANE = 128
SUBLANE = 8
CE_VMEM_BUDGET = 40 << 20          # budget used to pick the H tile
TAPS_VMEM_BUDGET = 8 << 20         # v5e-safe budget for the taps resize kernel


def _round_up(x, m):
    return ((x + m - 1) // m) * m


# --------------------------------------------------------------------------
# Separable interpolation matrices (align_corners=True / endpoint-aligned
# linear mapping).
# --------------------------------------------------------------------------
def _interp_matrix(out_size, in_size):
    m = np.zeros((out_size, in_size), dtype=np.float32)
    if out_size == 1 or in_size == 1:
        m[:, 0] = 1.0
        return m
    src = np.arange(out_size, dtype=np.float64) * (in_size - 1) / (out_size - 1)
    i0 = np.clip(np.floor(src).astype(np.int64), 0, in_size - 2)
    frac = (src - i0).astype(np.float32)
    rows = np.arange(out_size)
    m[rows, i0] = 1.0 - frac
    m[rows, i0 + 1] += frac
    return m


# --------------------------------------------------------------------------
# Tile-size helpers.
# --------------------------------------------------------------------------
def _pick_h_tile(h, c, hp_pad, wp, wpad, budget=CE_VMEM_BUDGET):
    """Rows of full-resolution output processed per grid step (fused kernel)."""
    if h <= 128:
        return h
    fixed = 4 * (2 * c * hp_pad * wp      # x double buffer
                 + 2 * wp * wpad          # Bt double buffer
                 + c * hp_pad * wpad      # tmp scratch (per image)
                 + 2 * 8 * LANE)          # partial-sum output
    for t in (128, 64, 32, 16, 8):
        per = 4 * t * (2 * hp_pad + (c + 4) * wpad)   # A, tgt, up scratch, accs
        if fixed + per <= budget:
            return t
    return 8


def _pick_slab_batch(s, hp_pad, wp, r, cpad, budget=TAPS_VMEM_BUDGET):
    """Slabs per grid step for the taps kernel (no divisibility requirement)."""
    per = 4 * (2 * hp_pad * wp + 2 * r * cpad + hp_pad * cpad)
    return int(max(1, min(s, 16, budget // max(per, 1))))


# --------------------------------------------------------------------------
# Pallas kernel 1: "taps" separable resize for the OHEM threshold.
#   x2d: (S_pad*hp_pad, wp) f32, A: (R, hp_pad), Bt: (wp, Cpad)
#   out: (S_pad, R, Cpad) = A @ x[s] @ Bt per slab.
# The first contraction folds the whole slab batch into M (one big lane-dense
# MXU matmul); the second is a small per-slab matmul.
# --------------------------------------------------------------------------
def taps_resize(x2d, a_rows, bt, s_pad, bs, hp_pad, wp, r, cpad):
    def kernel(a_ref, x_ref, bt_ref, o_ref):
        a_m = a_ref[...]
        tmp = jnp.dot(x_ref[...], bt_ref[...],
                      preferred_element_type=jnp.float32)     # (bs*hp_pad, cpad)
        for b in range(bs):                                   # static unroll
            o_ref[b] = jnp.dot(a_m, tmp[b * hp_pad:(b + 1) * hp_pad, :],
                               preferred_element_type=jnp.float32)

    return pl.pallas_call(
        kernel,
        out_shape=jax.ShapeDtypeStruct((s_pad, r, cpad), jnp.float32),
        grid_spec=pltpu.PrefetchScalarGridSpec(
            num_scalar_prefetch=0,
            grid=(s_pad // bs,),
            in_specs=[
                pl.BlockSpec((r, hp_pad), lambda i: (0, 0)),          # A (const)
                pl.BlockSpec((bs * hp_pad, wp), lambda i: (i, 0)),    # x slabs
                pl.BlockSpec((wp, cpad), lambda i: (0, 0)),           # Bt (const)
            ],
            out_specs=pl.BlockSpec((bs, r, cpad), lambda i: (i, 0, 0)),
        ),
        compiler_params=pltpu.CompilerParams(dimension_semantics=("parallel",)),
    )(a_rows, x2d, bt)


# --------------------------------------------------------------------------
# Pallas kernel 2: FUSED bilinear upsample + OHEM softmax cross entropy.
#   nlt:   (1,) f32 SMEM                  -log(threshold) (or -inf)
#   a:     (grid_h*th, hp_pad) f32        row-interp matrix (zero-padded rows)
#   x:     (N, C*hp_pad, wp) f32          source logits (hp zero-padded)
#   bt:    (wp, wpad) f32                 col-interp matrix (zero-padded cols)
#   tgt:   (N, grid_h*th, wpad) int32     labels (pads carry IGNORE_INDEX)
#   out:   (N, 8, 128) f32                per-image [loss_sum, kept_count]
# --------------------------------------------------------------------------
def fused_upsample_ohem_ce(nlt, a_full, x_main, bt_pad, tgt_pad,
                           num_images, num_classes, hp_pad, wp, th, grid_h, wpad):
    def kernel(nlt_ref, a_ref, x_ref, bt_ref, tgt_ref, out_ref,
               tmp_s, up_s, acc_loss, acc_cnt):
        t = pl.program_id(1)

        @pl.when(t == 0)
        def _():
            # Per-image: tmp = X @ Bt, classes folded into M (lane-dense Wpad).
            tmp_s[...] = jnp.dot(x_ref[0], bt_ref[...],
                                 preferred_element_type=jnp.float32)
            acc_loss[...] = jnp.zeros_like(acc_loss)
            acc_cnt[...] = jnp.zeros_like(acc_cnt)

        a_t = a_ref[...]                     # (th, hp_pad)
        tgt = tgt_ref[0]                     # (th, wpad) int32
        nlt_v = nlt_ref[0]

        # Pass 1: per-class upsampled tile -> VMEM scratch; running class max
        # and true-class logit folded into the same loop.
        m = None
        true_logit = None
        for c_ in range(num_classes):
            u = jnp.dot(a_t, tmp_s[c_ * hp_pad:(c_ + 1) * hp_pad, :],
                        preferred_element_type=jnp.float32)   # (th, wpad)
            up_s[c_] = u
            sel = jnp.where(tgt == c_, u, 0.0)
            if c_ == 0:
                m = u
                true_logit = sel
            else:
                m = jnp.maximum(m, u)
                true_logit = true_logit + sel

        # Pass 2: pure sub/exp/add over the scratch-resident logits.
        sum_exp = jnp.exp(up_s[0] - m)
        for c_ in range(1, num_classes):
            sum_exp = sum_exp + jnp.exp(up_s[c_] - m)

        nll = jnp.log(sum_exp) + m - true_logit          # -log_softmax[label]
        # OHEM keep test in nll space:  prob_true <= thr  <=>  nll >= -log(thr)
        kept = jnp.logical_and(tgt != IGNORE_INDEX, nll >= nlt_v)
        acc_loss[...] += jnp.where(kept, nll, 0.0)
        acc_cnt[...] += kept.astype(jnp.float32)

        @pl.when(t == grid_h - 1)
        def _():
            loss_s = jnp.sum(acc_loss[...])
            cnt_s = jnp.sum(acc_cnt[...])
            rr = lax.broadcasted_iota(jnp.int32, (8, LANE), 0)
            ll = lax.broadcasted_iota(jnp.int32, (8, LANE), 1)
            tile = jnp.where(jnp.logical_and(rr == 0, ll == 0), loss_s, 0.0)
            tile = jnp.where(jnp.logical_and(rr == 0, ll == 1), cnt_s, tile)
            out_ref[0] = tile

    return pl.pallas_call(
        kernel,
        out_shape=jax.ShapeDtypeStruct((num_images, 8, LANE), jnp.float32),
        grid_spec=pltpu.PrefetchScalarGridSpec(
            num_scalar_prefetch=0,
            grid=(num_images, grid_h),
            in_specs=[
                pl.BlockSpec(memory_space=pltpu.MemorySpace.SMEM),         # nlt
                pl.BlockSpec((th, hp_pad), lambda i, t: (t, 0)),            # A rows
                pl.BlockSpec((1, num_classes * hp_pad, wp),
                             lambda i, t: (i, 0, 0)),                       # x (per image)
                pl.BlockSpec((wp, wpad), lambda i, t: (0, 0)),              # Bt (const)
                pl.BlockSpec((1, th, wpad), lambda i, t: (i, t, 0)),        # target
            ],
            out_specs=pl.BlockSpec((1, 8, LANE), lambda i, t: (i, 0, 0)),
            scratch_shapes=[
                pltpu.VMEM((num_classes * hp_pad, wpad), jnp.float32),  # tmp = X@Bt
                pltpu.VMEM((num_classes, th, wpad), jnp.float32),       # per-class tile
                pltpu.VMEM((th, wpad), jnp.float32),                    # loss acc
                pltpu.VMEM((th, wpad), jnp.float32),                    # count acc
            ],
        ),
        compiler_params=pltpu.CompilerParams(
            dimension_semantics=("parallel", "arbitrary"),
            vmem_limit_bytes=64 * 1024 * 1024),
    )(nlt, a_full, x_main, bt_pad, tgt_pad)


# --------------------------------------------------------------------------
# Full module forward.
# --------------------------------------------------------------------------
def criterion_ohem_cross_entropy(preds, target):
    """preds: (N, C, hp, wp) f32 NCHW logits; target: (N, H, W) int labels."""
    n, c, hp, wp = preds.shape
    hh, ww = int(target.shape[1]), int(target.shape[2])
    wpad = _round_up(ww, LANE)
    hp_pad = _round_up(hp, SUBLANE)

    # Interpolation matrices for the align_corners=True bilinear upsample.
    a_h = _interp_matrix(hh, hp)                       # (H, hp)
    a_w = _interp_matrix(ww, wp)                       # (W, wp)
    bt_pad = np.zeros((wp, wpad), np.float32)          # lane-pad output W axis
    bt_pad[:, :ww] = a_w.T

    # Source logits, hp padded to a sublane multiple (zero rows).
    x_pad = preds.astype(jnp.float32)
    if hp_pad > hp:
        x_pad = jnp.pad(x_pad, ((0, 0), (0, 0), (0, hp_pad - hp), (0, 0)))
    x_main = x_pad.reshape(n, c * hp_pad, wp)

    # ---------------------------------------------------------------------
    # OHEM threshold from /8-downsampled softmax probs.  The full-resolution
    # softmax is never materialized: softmax is evaluated only at the few
    # full-res taps the downsample reads, then the small restricted zoom
    # matrices are applied in plain JAX.
    # ---------------------------------------------------------------------
    hd = max(int(round(hh / FACTOR)), 1)
    wd = max(int(round(ww / FACTOR)), 1)
    d_h = _interp_matrix(hd, hh)                       # (hd, H) zoom order=1
    d_w = _interp_matrix(wd, ww)                       # (wd, W)
    rows_needed = np.nonzero(np.abs(d_h).sum(axis=0) > 0)[0]
    cols_needed = np.nonzero(np.abs(d_w).sum(axis=0) > 0)[0]
    r = int(rows_needed.size)
    cn = int(cols_needed.size)
    cpad = _round_up(cn, LANE)

    a_rows = np.zeros((r, hp_pad), np.float32)
    a_rows[:, :hp] = a_h[rows_needed]
    bt_taps = np.zeros((wp, cpad), np.float32)
    bt_taps[:, :cn] = a_w[cols_needed].T

    s = n * c
    bs = _pick_slab_batch(s, hp_pad, wp, r, cpad)
    s_pad = _round_up(s, bs)
    x_slabs = x_pad.reshape(s, hp_pad, wp)
    if s_pad > s:
        x_slabs = jnp.pad(x_slabs, ((0, s_pad - s), (0, 0), (0, 0)))
    taps = taps_resize(x_slabs.reshape(s_pad * hp_pad, wp),
                       jnp.asarray(a_rows), jnp.asarray(bt_taps),
                       s_pad, bs, hp_pad, wp, r, cpad)         # (s_pad, r, cpad)
    taps = taps[:s, :, :cn].reshape(n, c, r, cn)
    probs_taps = jax.nn.softmax(taps, axis=1)
    prob_ds = jnp.einsum(
        "hr,ncrq,wq->nchw",
        jnp.asarray(d_h[:, rows_needed], jnp.float32), probs_taps,
        jnp.asarray(d_w[:, cols_needed], jnp.float32))         # (n, c, hd, wd)

    # TODO(synk): scipy.ndimage.zoom(order=0) half-pixel rounding may differ at
    # non-integer sample coordinates; here we use align-corners nearest sampling.
    t_rows = (np.zeros((1,), np.int32) if hd == 1
              else np.round(np.arange(hd) * (hh - 1) / (hd - 1)).astype(np.int32))
    t_cols = (np.zeros((1,), np.int32) if wd == 1
              else np.round(np.arange(wd) * (ww - 1) / (wd - 1)).astype(np.int32))
    target_ds = target[:, t_rows][:, :, t_cols]

    min_kept_ds = MIN_KEPT // (FACTOR * FACTOR)
    total = n * hd * wd
    labels = target_ds.reshape(-1).astype(jnp.int32)
    probs2 = jnp.transpose(prob_ds, (1, 0, 2, 3)).reshape(c, -1)
    valid = labels != IGNORE_INDEX
    num_valid = jnp.sum(valid)
    safe_labels = jnp.where(valid, labels, 0)
    pred = probs2[safe_labels, jnp.arange(total)]
    pred_masked = jnp.where(valid, pred, jnp.inf)

    thr = jnp.float32(THRESH)
    if min_kept_ds > 0:
        k_static = min(min_kept_ds, total)
        neg_topk, _ = lax.top_k(-pred_masked, k_static)
        smallest = -neg_topk                          # k smallest preds, ascending
        k_th = jnp.clip(jnp.minimum(num_valid, min_kept_ds) - 1, 0, k_static - 1)
        new_thr = smallest[k_th]
        thr = jnp.where(new_thr > THRESH, new_thr, thr)
    thr = jnp.where(min_kept_ds >= num_valid, jnp.float32(1.0), thr)
    thr = thr.astype(jnp.float32)
    # threshold >= 1.0  => keep every valid pixel (avoid nll>=0 rounding drops)
    nlt = jnp.where(thr >= 1.0, jnp.float32(-jnp.inf), -jnp.log(thr))
    nlt = jnp.reshape(nlt, (1,))

    # ---------------------------------------------------------------------
    # Fused upsample + hard-example-mined cross entropy.
    # ---------------------------------------------------------------------
    th_tile = _pick_h_tile(hh, c, hp_pad, wp, wpad)
    grid_h = (hh + th_tile - 1) // th_tile
    hpad2 = grid_h * th_tile
    a_full = np.zeros((hpad2, hp_pad), np.float32)     # zero-padded rows/cols
    a_full[:hh, :hp] = a_h

    tgt_pad = target.astype(jnp.int32)
    if hpad2 > hh or wpad > ww:                        # pads excluded via ignore
        tgt_pad = jnp.pad(tgt_pad, ((0, 0), (0, hpad2 - hh), (0, wpad - ww)),
                          constant_values=IGNORE_INDEX)

    partials = fused_upsample_ohem_ce(
        nlt, jnp.asarray(a_full), x_main, jnp.asarray(bt_pad), tgt_pad,
        n, c, hp_pad, wp, th_tile, grid_h, wpad)       # (n, 8, 128)

    loss_sum = jnp.sum(partials[:, 0, 0])
    cnt_sum = jnp.sum(partials[:, 0, 1])
    # NaN if nothing is kept, matching PyTorch CE mean-over-empty behavior.
    return loss_sum / cnt_sum


if __name__ == "__main__":
    key = jax.random.PRNGKey(0)
    k1, k2, k3 = jax.random.split(key, 3)
    N, C = 2, 5
    hp, wp = 8, 8        # prediction resolution (segmentation head output)
    H, W = 16, 16        # target resolution

    preds = jax.random.normal(k1, (N, C, hp, wp), dtype=jnp.float32)
    target = jax.random.randint(k2, (N, H, W), 0, C, dtype=jnp.int32)
    ign = jax.random.bernoulli(k3, 0.1, (N, H, W))
    target = jnp.where(ign, IGNORE_INDEX, target)

    loss = jax.jit(criterion_ohem_cross_entropy)(preds, target)
    jax.block_until_ready(loss)
    assert loss.shape == () and bool(jnp.isfinite(loss))
    print("KERNEL_OK")
</pallas_src>

<mosaic_0001>
module attributes {stable_mosaic.version = 11 : i64} {
  func.func @kernel(%arg0: i32, %arg1: memref<2x8xf32, #tpu.memory_space<vmem>>, %arg2: memref<80x8xf32, #tpu.memory_space<vmem>>, %arg3: memref<8x128xf32, #tpu.memory_space<vmem>>, %arg4: memref<10x2x128xf32, #tpu.memory_space<vmem>>) attributes {dimension_semantics = [#tpu.dimension_semantics<parallel>], iteration_bounds = array<i64: 1>, scalar_prefetch = 0 : i64, scratch_operands = 0 : i64, tpu.core_type = #tpu.core_type<tc>, window_params = [{pipeline_mode = #tpu.pipeline_mode<synchronous>, transform_indices = @transform_0, window_bounds = array<i64: 2, 8>}, {transform_indices = @transform_1, window_bounds = array<i64: 80, 8>}, {pipeline_mode = #tpu.pipeline_mode<synchronous>, transform_indices = @transform_2, window_bounds = array<i64: 8, 128>}, {transform_indices = @transform_3, window_bounds = array<i64: 10, 2, 128>}]} {
    %c0 = arith.constant 0 : index
    %c0_0 = arith.constant 0 : index
    %0 = vector.load %arg1[%c0, %c0_0] : memref<2x8xf32, #tpu.memory_space<vmem>>, vector<2x8xf32>
    %c0_1 = arith.constant 0 : index
    %c0_2 = arith.constant 0 : index
    %1 = vector.load %arg2[%c0_1, %c0_2] : memref<80x8xf32, #tpu.memory_space<vmem>>, vector<80x8xf32>
    %c0_3 = arith.constant 0 : index
    %c0_4 = arith.constant 0 : index
    %2 = vector.load %arg3[%c0_3, %c0_4] : memref<8x128xf32, #tpu.memory_space<vmem>>, vector<8x128xf32>
    %cst = arith.constant dense<0.000000e+00> : vector<80x128xf32>
    %3 = tpu.matmul %1, %2, %cst {dimension_numbers = #tpu.dot_dimension_numbers<[1], [0], [0], [1], [0, 0, 1, 1], [], []>} : vector<80x8xf32>, vector<8x128xf32>, vector<80x128xf32> -> vector<80x128xf32>
    %4 = vector.extract_strided_slice %3 {offsets = [0, 0], sizes = [8, 128], strides = [1, 1]} : vector<80x128xf32> to vector<8x128xf32>
    %cst_5 = arith.constant dense<0.000000e+00> : vector<2x128xf32>
    %5 = tpu.matmul %0, %4, %cst_5 {dimension_numbers = #tpu.dot_dimension_numbers<[1], [0], [0], [1], [0, 0, 1, 1], [], []>} : vector<2x8xf32>, vector<8x128xf32>, vector<2x128xf32> -> vector<2x128xf32>
    %c0_6 = arith.constant 0 : index
    %c0_7 = arith.constant 0 : index
    %c0_8 = arith.constant 0 : index
    %6 = vector.load %arg4[%c0_6, %c0_7, %c0_8] : memref<10x2x128xf32, #tpu.memory_space<vmem>>, vector<1x2x128xf32>
    %7 = vector.shape_cast %6 : vector<1x2x128xf32> to vector<2x128xf32>
    %8 = vector.shape_cast %5 : vector<2x128xf32> to vector<1x2x128xf32>
    tpu.vector_store %arg4[%c0_6, %c0_7, %c0_8], %8 {strides = array<i32>} : memref<10x2x128xf32, #tpu.memory_space<vmem>>, vector<1x2x128xf32>,
    %9 = vector.extract_strided_slice %3 {offsets = [8, 0], sizes = [8, 128], strides = [1, 1]} : vector<80x128xf32> to vector<8x128xf32>
    %cst_9 = arith.constant dense<0.000000e+00> : vector<2x128xf32>
    %10 = tpu.matmul %0, %9, %cst_9 {dimension_numbers = #tpu.dot_dimension_numbers<[1], [0], [0], [1], [0, 0, 1, 1], [], []>} : vector<2x8xf32>, vector<8x128xf32>, vector<2x128xf32> -> vector<2x128xf32>
    %c1 = arith.constant 1 : index
    %c0_10 = arith.constant 0 : index
    %c0_11 = arith.constant 0 : index
    %11 = vector.load %arg4[%c1, %c0_10, %c0_11] : memref<10x2x128xf32, #tpu.memory_space<vmem>>, vector<1x2x128xf32>
    %12 = vector.shape_cast %11 : vector<1x2x128xf32> to vector<2x128xf32>
    %13 = vector.shape_cast %10 : vector<2x128xf32> to vector<1x2x128xf32>
    tpu.vector_store %arg4[%c1, %c0_10, %c0_11], %13 {strides = array<i32>} : memref<10x2x128xf32, #tpu.memory_space<vmem>>, vector<1x2x128xf32>,
    %14 = vector.extract_strided_slice %3 {offsets = [16, 0], sizes = [8, 128], strides = [1, 1]} : vector<80x128xf32> to vector<8x128xf32>
    %cst_12 = arith.constant dense<0.000000e+00> : vector<2x128xf32>
    %15 = tpu.matmul %0, %14, %cst_12 {dimension_numbers = #tpu.dot_dimension_numbers<[1], [0], [0], [1], [0, 0, 1, 1], [], []>} : vector<2x8xf32>, vector<8x128xf32>, vector<2x128xf32> -> vector<2x128xf32>
    %c2 = arith.constant 2 : index
    %c0_13 = arith.constant 0 : index
    %c0_14 = arith.constant 0 : index
    %16 = vector.load %arg4[%c2, %c0_13, %c0_14] : memref<10x2x128xf32, #tpu.memory_space<vmem>>, vector<1x2x128xf32>
    %17 = vector.shape_cast %16 : vector<1x2x128xf32> to vector<2x128xf32>
    %18 = vector.shape_cast %15 : vector<2x128xf32> to vector<1x2x128xf32>
    tpu.vector_store %arg4[%c2, %c0_13, %c0_14], %18 {strides = array<i32>} : memref<10x2x128xf32, #tpu.memory_space<vmem>>, vector<1x2x128xf32>,
    %19 = vector.extract_strided_slice %3 {offsets = [24, 0], sizes = [8, 128], strides = [1, 1]} : vector<80x128xf32> to vector<8x128xf32>
    %cst_15 = arith.constant dense<0.000000e+00> : vector<2x128xf32>
    %20 = tpu.matmul %0, %19, %cst_15 {dimension_numbers = #tpu.dot_dimension_numbers<[1], [0], [0], [1], [0, 0, 1, 1], [], []>} : vector<2x8xf32>, vector<8x128xf32>, vector<2x128xf32> -> vector<2x128xf32>
    %c3 = arith.constant 3 : index
    %c0_16 = arith.constant 0 : index
    %c0_17 = arith.constant 0 : index
    %21 = vector.load %arg4[%c3, %c0_16, %c0_17] : memref<10x2x128xf32, #tpu.memory_space<vmem>>, vector<1x2x128xf32>
    %22 = vector.shape_cast %21 : vector<1x2x128xf32> to vector<2x128xf32>
    %23 = vector.shape_cast %20 : vector<2x128xf32> to vector<1x2x128xf32>
    tpu.vector_store %arg4[%c3, %c0_16, %c0_17], %23 {strides = array<i32>} : memref<10x2x128xf32, #tpu.memory_space<vmem>>, vector<1x2x128xf32>,
    %24 = vector.extract_strided_slice %3 {offsets = [32, 0], sizes = [8, 128], strides = [1, 1]} : vector<80x128xf32> to vector<8x128xf32>
    %cst_18 = arith.constant dense<0.000000e+00> : vector<2x128xf32>
    %25 = tpu.matmul %0, %24, %cst_18 {dimension_numbers = #tpu.dot_dimension_numbers<[1], [0], [0], [1], [0, 0, 1, 1], [], []>} : vector<2x8xf32>, vector<8x128xf32>, vector<2x128xf32> -> vector<2x128xf32>
    %c4 = arith.constant 4 : index
    %c0_19 = arith.constant 0 : index
    %c0_20 = arith.constant 0 : index
    %26 = vector.load %arg4[%c4, %c0_19, %c0_20] : memref<10x2x128xf32, #tpu.memory_space<vmem>>, vector<1x2x128xf32>
    %27 = vector.shape_cast %26 : vector<1x2x128xf32> to vector<2x128xf32>
    %28 = vector.shape_cast %25 : vector<2x128xf32> to vector<1x2x128xf32>
    tpu.vector_store %arg4[%c4, %c0_19, %c0_20], %28 {strides = array<i32>} : memref<10x2x128xf32, #tpu.memory_space<vmem>>, vector<1x2x128xf32>,
    %29 = vector.extract_strided_slice %3 {offsets = [40, 0], sizes = [8, 128], strides = [1, 1]} : vector<80x128xf32> to vector<8x128xf32>
    %cst_21 = arith.constant dense<0.000000e+00> : vector<2x128xf32>
    %30 = tpu.matmul %0, %29, %cst_21 {dimension_numbers = #tpu.dot_dimension_numbers<[1], [0], [0], [1], [0, 0, 1, 1], [], []>} : vector<2x8xf32>, vector<8x128xf32>, vector<2x128xf32> -> vector<2x128xf32>
    %c5 = arith.constant 5 : index
    %c0_22 = arith.constant 0 : index
    %c0_23 = arith.constant 0 : index
    %31 = vector.load %arg4[%c5, %c0_22, %c0_23] : memref<10x2x128xf32, #tpu.memory_space<vmem>>, vector<1x2x128xf32>
    %32 = vector.shape_cast %31 : vector<1x2x128xf32> to vector<2x128xf32>
    %33 = vector.shape_cast %30 : vector<2x128xf32> to vector<1x2x128xf32>
    tpu.vector_store %arg4[%c5, %c0_22, %c0_23], %33 {strides = array<i32>} : memref<10x2x128xf32, #tpu.memory_space<vmem>>, vector<1x2x128xf32>,
    %34 = vector.extract_strided_slice %3 {offsets = [48, 0], sizes = [8, 128], strides = [1, 1]} : vector<80x128xf32> to vector<8x128xf32>
    %cst_24 = arith.constant dense<0.000000e+00> : vector<2x128xf32>
    %35 = tpu.matmul %0, %34, %cst_24 {dimension_numbers = #tpu.dot_dimension_numbers<[1], [0], [0], [1], [0, 0, 1, 1], [], []>} : vector<2x8xf32>, vector<8x128xf32>, vector<2x128xf32> -> vector<2x128xf32>
    %c6 = arith.constant 6 : index
    %c0_25 = arith.constant 0 : index
    %c0_26 = arith.constant 0 : index
    %36 = vector.load %arg4[%c6, %c0_25, %c0_26] : memref<10x2x128xf32, #tpu.memory_space<vmem>>, vector<1x2x128xf32>
    %37 = vector.shape_cast %36 : vector<1x2x128xf32> to vector<2x128xf32>
    %38 = vector.shape_cast %35 : vector<2x128xf32> to vector<1x2x128xf32>
    tpu.vector_store %arg4[%c6, %c0_25, %c0_26], %38 {strides = array<i32>} : memref<10x2x128xf32, #tpu.memory_space<vmem>>, vector<1x2x128xf32>,
    %39 = vector.extract_strided_slice %3 {offsets = [56, 0], sizes = [8, 128], strides = [1, 1]} : vector<80x128xf32> to vector<8x128xf32>
    %cst_27 = arith.constant dense<0.000000e+00> : vector<2x128xf32>
    %40 = tpu.matmul %0, %39, %cst_27 {dimension_numbers = #tpu.dot_dimension_numbers<[1], [0], [0], [1], [0, 0, 1, 1], [], []>} : vector<2x8xf32>, vector<8x128xf32>, vector<2x128xf32> -> vector<2x128xf32>
    %c7 = arith.constant 7 : index
    %c0_28 = arith.constant 0 : index
    %c0_29 = arith.constant 0 : index
    %41 = vector.load %arg4[%c7, %c0_28, %c0_29] : memref<10x2x128xf32, #tpu.memory_space<vmem>>, vector<1x2x128xf32>
    %42 = vector.shape_cast %41 : vector<1x2x128xf32> to vector<2x128xf32>
    %43 = vector.shape_cast %40 : vector<2x128xf32> to vector<1x2x128xf32>
    tpu.vector_store %arg4[%c7, %c0_28, %c0_29], %43 {strides = array<i32>} : memref<10x2x128xf32, #tpu.memory_space<vmem>>, vector<1x2x128xf32>,
    %44 = vector.extract_strided_slice %3 {offsets = [64, 0], sizes = [8, 128], strides = [1, 1]} : vector<80x128xf32> to vector<8x128xf32>
    %cst_30 = arith.constant dense<0.000000e+00> : vector<2x128xf32>
    %45 = tpu.matmul %0, %44, %cst_30 {dimension_numbers = #tpu.dot_dimension_numbers<[1], [0], [0], [1], [0, 0, 1, 1], [], []>} : vector<2x8xf32>, vector<8x128xf32>, vector<2x128xf32> -> vector<2x128xf32>
    %c8 = arith.constant 8 : index
    %c0_31 = arith.constant 0 : index
    %c0_32 = arith.constant 0 : index
    %46 = vector.load %arg4[%c8, %c0_31, %c0_32] : memref<10x2x128xf32, #tpu.memory_space<vmem>>, vector<1x2x128xf32>
    %47 = vector.shape_cast %46 : vector<1x2x128xf32> to vector<2x128xf32>
    %48 = vector.shape_cast %45 : vector<2x128xf32> to vector<1x2x128xf32>
    tpu.vector_store %arg4[%c8, %c0_31, %c0_32], %48 {strides = array<i32>} : memref<10x2x128xf32, #tpu.memory_space<vmem>>, vector<1x2x128xf32>,
    %49 = vector.extract_strided_slice %3 {offsets = [72, 0], sizes = [8, 128], strides = [1, 1]} : vector<80x128xf32> to vector<8x128xf32>
    %cst_33 = arith.constant dense<0.000000e+00> : vector<2x128xf32>
    %50 = tpu.matmul %0, %49, %cst_33 {dimension_numbers = #tpu.dot_dimension_numbers<[1], [0], [0], [1], [0, 0, 1, 1], [], []>} : vector<2x8xf32>, vector<8x128xf32>, vector<2x128xf32> -> vector<2x128xf32>
    %c9 = arith.constant 9 : index
    %c0_34 = arith.constant 0 : index
    %c0_35 = arith.constant 0 : index
    %51 = vector.load %arg4[%c9, %c0_34, %c0_35] : memref<10x2x128xf32, #tpu.memory_space<vmem>>, vector<1x2x128xf32>
    %52 = vector.shape_cast %51 : vector<1x2x128xf32> to vector<2x128xf32>
    %53 = vector.shape_cast %50 : vector<2x128xf32> to vector<1x2x128xf32>
    tpu.vector_store %arg4[%c9, %c0_34, %c0_35], %53 {strides = array<i32>} : memref<10x2x128xf32, #tpu.memory_space<vmem>>, vector<1x2x128xf32>,
    return
  }
  func.func @transform_0(%arg0: i32) -> (i32, i32) {
    %c0_i32 = arith.constant 0 : i32
    %c0_i32_0 = arith.constant 0 : i32
    %c0_i32_1 = arith.constant 0 : i32
    return %c0_i32, %c0_i32_0 : i32, i32
  }
  func.func @transform_1(%arg0: i32) -> (i32, i32) {
    %c0_i32 = arith.constant 0 : i32
    %c0_i32_0 = arith.constant 0 : i32
    return %arg0, %c0_i32 : i32, i32
  }
  func.func @transform_2(%arg0: i32) -> (i32, i32) {
    %c0_i32 = arith.constant 0 : i32
    %c0_i32_0 = arith.constant 0 : i32
    %c0_i32_1 = arith.constant 0 : i32
    return %c0_i32, %c0_i32_0 : i32, i32
  }
  func.func @transform_3(%arg0: i32) -> (i32, i32, i32) {
    %c0_i32 = arith.constant 0 : i32
    %c0_i32_0 = arith.constant 0 : i32
    %c0_i32_1 = arith.constant 0 : i32
    return %arg0, %c0_i32, %c0_i32_0 : i32, i32, i32
  }
}

module attributes {stable_mosaic.version = 11 : i64} {
  func.func @kernel(%arg0: i32, %arg1: i32, %arg2: memref<1xf32, #tpu.memory_space<smem>>, %arg3: memref<16x8xf32, #tpu.memory_space<vmem>>, %arg4: memref<1x40x8xf32, #tpu.memory_space<vmem>>, %arg5: memref<8x128xf32, #tpu.memory_space<vmem>>, %arg6: memref<1x16x128xi32, #tpu.memory_space<vmem>>, %arg7: memref<1x8x128xf32, #tpu.memory_space<vmem>>, %arg8: memref<40x128xf32, #tpu.memory_space<vmem>>, %arg9: memref<5x16x128xf32, #tpu.memory_space<vmem>>, %arg10: memref<16x128xf32, #tpu.memory_space<vmem>>, %arg11: memref<16x128xf32, #tpu.memory_space<vmem>>) attributes {dimension_semantics = [#tpu.dimension_semantics<parallel>, #tpu.dimension_semantics<arbitrary>], iteration_bounds = array<i64: 2, 1>, scalar_prefetch = 0 : i64, scratch_operands = 4 : i64, tpu.core_type = #tpu.core_type<tc>, window_params = [{transform_indices = @transform_0, window_bounds = array<i64: 1>}, {transform_indices = @transform_1, window_bounds = array<i64: 16, 8>}, {transform_indices = @transform_2, window_bounds = array<i64: 1, 40, 8>}, {pipeline_mode = #tpu.pipeline_mode<synchronous>, transform_indices = @transform_3, window_bounds = array<i64: 8, 128>}, {transform_indices = @transform_4, window_bounds = array<i64: 1, 16, 128>}, {transform_indices = @transform_5, window_bounds = array<i64: 1, 8, 128>}]} {
    %c0_i32 = arith.constant 0 : i32
    %0 = arith.cmpi eq, %arg1, %c0_i32 : i32
    %1 = arith.extui %0 : i1 to i32
    %c0_i32_0 = arith.constant 0 : i32
    %2 = arith.cmpi ne, %1, %c0_i32_0 : i32
    scf.if %2 {
      %c0_59 = arith.constant 0 : index
      %c0_60 = arith.constant 0 : index
      %c0_61 = arith.constant 0 : index
      %105 = vector.load %arg4[%c0_59, %c0_60, %c0_61] : memref<1x40x8xf32, #tpu.memory_space<vmem>>, vector<1x40x8xf32>
      %106 = vector.shape_cast %105 : vector<1x40x8xf32> to vector<40x8xf32>
      %c0_62 = arith.constant 0 : index
      %c0_63 = arith.constant 0 : index
      %107 = vector.load %arg5[%c0_62, %c0_63] : memref<8x128xf32, #tpu.memory_space<vmem>>, vector<8x128xf32>
      %cst_64 = arith.constant dense<0.000000e+00> : vector<40x128xf32>
      %108 = tpu.matmul %106, %107, %cst_64 {dimension_numbers = #tpu.dot_dimension_numbers<[1], [0], [0], [1], [0, 0, 1, 1], [], []>} : vector<40x8xf32>, vector<8x128xf32>, vector<40x128xf32> -> vector<40x128xf32>
      %c0_65 = arith.constant 0 : index
      %c0_66 = arith.constant 0 : index
      %109 = vector.load %arg8[%c0_65, %c0_66] : memref<40x128xf32, #tpu.memory_space<vmem>>, vector<40x128xf32>
      tpu.vector_store %arg8[%c0_65, %c0_66], %108 {strides = array<i32>} : memref<40x128xf32, #tpu.memory_space<vmem>>, vector<40x128xf32>,
      %cst_67 = arith.constant 0.000000e+00 : f32
      %110 = vector.broadcast %cst_67 : f32 to vector<16x128xf32>
      %c0_68 = arith.constant 0 : index
      %c0_69 = arith.constant 0 : index
      %111 = vector.load %arg10[%c0_68, %c0_69] : memref<16x128xf32, #tpu.memory_space<vmem>>, vector<16x128xf32>
      tpu.vector_store %arg10[%c0_68, %c0_69], %110 {strides = array<i32>} : memref<16x128xf32, #tpu.memory_space<vmem>>, vector<16x128xf32>,
      %cst_70 = arith.constant 0.000000e+00 : f32
      %112 = vector.broadcast %cst_70 : f32 to vector<16x128xf32>
      %c0_71 = arith.constant 0 : index
      %c0_72 = arith.constant 0 : index
      %113 = vector.load %arg11[%c0_71, %c0_72] : memref<16x128xf32, #tpu.memory_space<vmem>>, vector<16x128xf32>
      tpu.vector_store %arg11[%c0_71, %c0_72], %112 {strides = array<i32>} : memref<16x128xf32, #tpu.memory_space<vmem>>, vector<16x128xf32>,
    } else {
    }
    %c0 = arith.constant 0 : index
    %c0_1 = arith.constant 0 : index
    %3 = vector.load %arg3[%c0, %c0_1] : memref<16x8xf32, #tpu.memory_space<vmem>>, vector<16x8xf32>
    %c0_2 = arith.constant 0 : index
    %c0_3 = arith.constant 0 : index
    %c0_4 = arith.constant 0 : index
    %4 = vector.load %arg6[%c0_2, %c0_3, %c0_4] : memref<1x16x128xi32, #tpu.memory_space<vmem>>, vector<1x16x128xi32>
    %5 = vector.shape_cast %4 : vector<1x16x128xi32> to vector<16x128xi32>
    %c0_5 = arith.constant 0 : index
    %6 = memref.load %arg2[%c0_5] : memref<1xf32, #tpu.memory_space<smem>>
    %c0_6 = arith.constant 0 : index
    %c0_7 = arith.constant 0 : index
    %7 = vector.load %arg8[%c0_6, %c0_7] : memref<40x128xf32, #tpu.memory_space<vmem>>, vector<8x128xf32>
    %cst = arith.constant dense<0.000000e+00> : vector<16x128xf32>
    %8 = tpu.matmul %3, %7, %cst {dimension_numbers = #tpu.dot_dimension_numbers<[1], [0], [0], [1], [0, 0, 1, 1], [], []>} : vector<16x8xf32>, vector<8x128xf32>, vector<16x128xf32> -> vector<16x128xf32>
    %c0_8 = arith.constant 0 : index
    %c0_9 = arith.constant 0 : index
    %c0_10 = arith.constant 0 : index
    %9 = vector.load %arg9[%c0_8, %c0_9, %c0_10] : memref<5x16x128xf32, #tpu.memory_space<vmem>>, vector<1x16x128xf32>
    %10 = vector.shape_cast %9 : vector<1x16x128xf32> to vector<16x128xf32>
    %11 = vector.shape_cast %8 : vector<16x128xf32> to vector<1x16x128xf32>
    tpu.vector_store %arg9[%c0_8, %c0_9, %c0_10], %11 {strides = array<i32>} : memref<5x16x128xf32, #tpu.memory_space<vmem>>, vector<1x16x128xf32>,
    %c0_i32_11 = arith.constant 0 : i32
    %12 = vector.broadcast %c0_i32_11 : i32 to vector<16x128xi32>
    %13 = arith.cmpi eq, %5, %12 : vector<16x128xi32>
    %cst_12 = arith.constant 0.000000e+00 : f32
    %14 = vector.broadcast %cst_12 : f32 to vector<16x128xf32>
    %15 = arith.select %13, %8, %14 : vector<16x128xi1>, vector<16x128xf32>
    %c8 = arith.constant 8 : index
    %c0_13 = arith.constant 0 : index
    %16 = vector.load %arg8[%c8, %c0_13] : memref<40x128xf32, #tpu.memory_space<vmem>>, vector<8x128xf32>
    %cst_14 = arith.constant dense<0.000000e+00> : vector<16x128xf32>
    %17 = tpu.matmul %3, %16, %cst_14 {dimension_numbers = #tpu.dot_dimension_numbers<[1], [0], [0], [1], [0, 0, 1, 1], [], []>} : vector<16x8xf32>, vector<8x128xf32>, vector<16x128xf32> -> vector<16x128xf32>
    %c1 = arith.constant 1 : index
    %c0_15 = arith.constant 0 : index
    %c0_16 = arith.constant 0 : index
    %18 = vector.load %arg9[%c1, %c0_15, %c0_16] : memref<5x16x128xf32, #tpu.memory_space<vmem>>, vector<1x16x128xf32>
    %19 = vector.shape_cast %18 : vector<1x16x128xf32> to vector<16x128xf32>
    %20 = vector.shape_cast %17 : vector<16x128xf32> to vector<1x16x128xf32>
    tpu.vector_store %arg9[%c1, %c0_15, %c0_16], %20 {strides = array<i32>} : memref<5x16x128xf32, #tpu.memory_space<vmem>>, vector<1x16x128xf32>,
    %c1_i32 = arith.constant 1 : i32
    %21 = vector.broadcast %c1_i32 : i32 to vector<16x128xi32>
    %22 = arith.cmpi eq, %5, %21 : vector<16x128xi32>
    %cst_17 = arith.constant 0.000000e+00 : f32
    %23 = vector.broadcast %cst_17 : f32 to vector<16x128xf32>
    %24 = arith.select %22, %17, %23 : vector<16x128xi1>, vector<16x128xf32>
    %25 = arith.maximumf %8, %17 : vector<16x128xf32>
    %26 = arith.addf %15, %24 : vector<16x128xf32>
    %c16 = arith.constant 16 : index
    %c0_18 = arith.constant 0 : index
    %27 = vector.load %arg8[%c16, %c0_18] : memref<40x128xf32, #tpu.memory_space<vmem>>, vector<8x128xf32>
    %cst_19 = arith.constant dense<0.000000e+00> : vector<16x128xf32>
    %28 = tpu.matmul %3, %27, %cst_19 {dimension_numbers = #tpu.dot_dimension_numbers<[1], [0], [0], [1], [0, 0, 1, 1], [], []>} : vector<16x8xf32>, vector<8x128xf32>, vector<16x128xf32> -> vector<16x128xf32>
    %c2 = arith.constant 2 : index
    %c0_20 = arith.constant 0 : index
    %c0_21 = arith.constant 0 : index
    %29 = vector.load %arg9[%c2, %c0_20, %c0_21] : memref<5x16x128xf32, #tpu.memory_space<vmem>>, vector<1x16x128xf32>
    %30 = vector.shape_cast %29 : vector<1x16x128xf32> to vector<16x128xf32>
    %31 = vector.shape_cast %28 : vector<16x128xf32> to vector<1x16x128xf32>
    tpu.vector_store %arg9[%c2, %c0_20, %c0_21], %31 {strides = array<i32>} : memref<5x16x128xf32, #tpu.memory_space<vmem>>, vector<1x16x128xf32>,
    %c2_i32 = arith.constant 2 : i32
    %32 = vector.broadcast %c2_i32 : i32 to vector<16x128xi32>
    %33 = arith.cmpi eq, %5, %32 : vector<16x128xi32>
    %cst_22 = arith.constant 0.000000e+00 : f32
    %34 = vector.broadcast %cst_22 : f32 to vector<16x128xf32>
    %35 = arith.select %33, %28, %34 : vector<16x128xi1>, vector<16x128xf32>
    %36 = arith.maximumf %25, %28 : vector<16x128xf32>
    %37 = arith.addf %26, %35 : vector<16x128xf32>
    %c24 = arith.constant 24 : index
    %c0_23 = arith.constant 0 : index
    %38 = vector.load %arg8[%c24, %c0_23] : memref<40x128xf32, #tpu.memory_space<vmem>>, vector<8x128xf32>
    %cst_24 = arith.constant dense<0.000000e+00> : vector<16x128xf32>
    %39 = tpu.matmul %3, %38, %cst_24 {dimension_numbers = #tpu.dot_dimension_numbers<[1], [0], [0], [1], [0, 0, 1, 1], [], []>} : vector<16x8xf32>, vector<8x128xf32>, vector<16x128xf32> -> vector<16x128xf32>
    %c3 = arith.constant 3 : index
    %c0_25 = arith.constant 0 : index
    %c0_26 = arith.constant 0 : index
    %40 = vector.load %arg9[%c3, %c0_25, %c0_26] : memref<5x16x128xf32, #tpu.memory_space<vmem>>, vector<1x16x128xf32>
    %41 = vector.shape_cast %40 : vector<1x16x128xf32> to vector<16x128xf32>
    %42 = vector.shape_cast %39 : vector<16x128xf32> to vector<1x16x128xf32>
    tpu.vector_store %arg9[%c3, %c0_25, %c0_26], %42 {strides = array<i32>} : memref<5x16x128xf32, #tpu.memory_space<vmem>>, vector<1x16x128xf32>,
    %c3_i32 = arith.constant 3 : i32
    %43 = vector.broadcast %c3_i32 : i32 to vector<16x128xi32>
    %44 = arith.cmpi eq, %5, %43 : vector<16x128xi32>
    %cst_27 = arith.constant 0.000000e+00 : f32
    %45 = vector.broadcast %cst_27 : f32 to vector<16x128xf32>
    %46 = arith.select %44, %39, %45 : vector<16x128xi1>, vector<16x128xf32>
    %47 = arith.maximumf %36, %39 : vector<16x128xf32>
    %48 = arith.addf %37, %46 : vector<16x128xf32>
    %c32 = arith.constant 32 : index
    %c0_28 = arith.constant 0 : index
    %49 = vector.load %arg8[%c32, %c0_28] : memref<40x128xf32, #tpu.memory_space<vmem>>, vector<8x128xf32>
    %cst_29 = arith.constant dense<0.000000e+00> : vector<16x128xf32>
    %50 = tpu.matmul %3, %49, %cst_29 {dimension_numbers = #tpu.dot_dimension_numbers<[1], [0], [0], [1], [0, 0, 1, 1], [], []>} : vector<16x8xf32>, vector<8x128xf32>, vector<16x128xf32> -> vector<16x128xf32>
    %c4 = arith.constant 4 : index
    %c0_30 = arith.constant 0 : index
    %c0_31 = arith.constant 0 : index
    %51 = vector.load %arg9[%c4, %c0_30, %c0_31] : memref<5x16x128xf32, #tpu.memory_space<vmem>>, vector<1x16x128xf32>
    %52 = vector.shape_cast %51 : vector<1x16x128xf32> to vector<16x128xf32>
    %53 = vector.shape_cast %50 : vector<16x128xf32> to vector<1x16x128xf32>
    tpu.vector_store %arg9[%c4, %c0_30, %c0_31], %53 {strides = array<i32>} : memref<5x16x128xf32, #tpu.memory_space<vmem>>, vector<1x16x128xf32>,
    %c4_i32 = arith.constant 4 : i32
    %54 = vector.broadcast %c4_i32 : i32 to vector<16x128xi32>
    %55 = arith.cmpi eq, %5, %54 : vector<16x128xi32>
    %cst_32 = arith.constant 0.000000e+00 : f32
    %56 = vector.broadcast %cst_32 : f32 to vector<16x128xf32>
    %57 = arith.select %55, %50, %56 : vector<16x128xi1>, vector<16x128xf32>
    %58 = arith.maximumf %47, %50 : vector<16x128xf32>
    %59 = arith.addf %48, %57 : vector<16x128xf32>
    %c0_33 = arith.constant 0 : index
    %c0_34 = arith.constant 0 : index
    %c0_35 = arith.constant 0 : index
    %60 = vector.load %arg9[%c0_33, %c0_34, %c0_35] : memref<5x16x128xf32, #tpu.memory_space<vmem>>, vector<1x16x128xf32>
    %61 = vector.shape_cast %60 : vector<1x16x128xf32> to vector<16x128xf32>
    %62 = arith.subf %61, %58 : vector<16x128xf32>
    %63 = math.exp %62 : vector<16x128xf32>
    %c1_36 = arith.constant 1 : index
    %c0_37 = arith.constant 0 : index
    %c0_38 = arith.constant 0 : index
    %64 = vector.load %arg9[%c1_36, %c0_37, %c0_38] : memref<5x16x128xf32, #tpu.memory_space<vmem>>, vector<1x16x128xf32>
    %65 = vector.shape_cast %64 : vector<1x16x128xf32> to vector<16x128xf32>
    %66 = arith.subf %65, %58 : vector<16x128xf32>
    %67 = math.exp %66 : vector<16x128xf32>
    %68 = arith.addf %63, %67 : vector<16x128xf32>
    %c2_39 = arith.constant 2 : index
    %c0_40 = arith.constant 0 : index
    %c0_41 = arith.constant 0 : index
    %69 = vector.load %arg9[%c2_39, %c0_40, %c0_41] : memref<5x16x128xf32, #tpu.memory_space<vmem>>, vector<1x16x128xf32>
    %70 = vector.shape_cast %69 : vector<1x16x128xf32> to vector<16x128xf32>
    %71 = arith.subf %70, %58 : vector<16x128xf32>
    %72 = math.exp %71 : vector<16x128xf32>
    %73 = arith.addf %68, %72 : vector<16x128xf32>
    %c3_42 = arith.constant 3 : index
    %c0_43 = arith.constant 0 : index
    %c0_44 = arith.constant 0 : index
    %74 = vector.load %arg9[%c3_42, %c0_43, %c0_44] : memref<5x16x128xf32, #tpu.memory_space<vmem>>, vector<1x16x128xf32>
    %75 = vector.shape_cast %74 : vector<1x16x128xf32> to vector<16x128xf32>
    %76 = arith.subf %75, %58 : vector<16x128xf32>
    %77 = math.exp %76 : vector<16x128xf32>
    %78 = arith.addf %73, %77 : vector<16x128xf32>
    %c4_45 = arith.constant 4 : index
    %c0_46 = arith.constant 0 : index
    %c0_47 = arith.constant 0 : index
    %79 = vector.load %arg9[%c4_45, %c0_46, %c0_47] : memref<5x16x128xf32, #tpu.memory_space<vmem>>, vector<1x16x128xf32>
    %80 = vector.shape_cast %79 : vector<1x16x128xf32> to vector<16x128xf32>
    %81 = arith.subf %80, %58 : vector<16x128xf32>
    %82 = math.exp %81 : vector<16x128xf32>
    %83 = arith.addf %78, %82 : vector<16x128xf32>
    %84 = math.log %83 : vector<16x128xf32>
    %85 = arith.addf %84, %58 : vector<16x128xf32>
    %86 = arith.subf %85, %59 : vector<16x128xf32>
    %c255_i32 = arith.constant 255 : i32
    %87 = vector.broadcast %c255_i32 : i32 to vector<16x128xi32>
    %88 = arith.cmpi ne, %5, %87 : vector<16x128xi32>
    %89 = vector.broadcast %6 : f32 to vector<16x128xf32>
    %90 = arith.cmpf oge, %86, %89 : vector<16x128xf32>
    %91 = arith.andi %88, %90 : vector<16x128xi1>
    %c0_48 = arith.constant 0 : index
    %c0_49 = arith.constant 0 : index
    %92 = vector.load %arg10[%c0_48, %c0_49] : memref<16x128xf32, #tpu.memory_space<vmem>>, vector<16x128xf32>
    %cst_50 = arith.constant 0.000000e+00 : f32
    %93 = vector.broadcast %cst_50 : f32 to vector<16x128xf32>
    %94 = arith.select %91, %86, %93 : vector<16x128xi1>, vector<16x128xf32>
    %95 = arith.addf %92, %94 : vector<16x128xf32>
    %c0_51 = arith.constant 0 : index
    %c0_52 = arith.constant 0 : index
    %96 = vector.load %arg10[%c0_51, %c0_52] : memref<16x128xf32, #tpu.memory_space<vmem>>, vector<16x128xf32>
    tpu.vector_store %arg10[%c0_51, %c0_52], %95 {strides = array<i32>} : memref<16x128xf32, #tpu.memory_space<vmem>>, vector<16x128xf32>,
    %c0_53 = arith.constant 0 : index
    %c0_54 = arith.constant 0 : index
    %97 = vector.load %arg11[%c0_53, %c0_54] : memref<16x128xf32, #tpu.memory_space<vmem>>, vector<16x128xf32>
    %98 = arith.extui %91 : vector<16x128xi1> to vector<16x128xi32>
    %99 = arith.sitofp %98 : vector<16x128xi32> to vector<16x128xf32>
    %100 = arith.addf %97, %99 : vector<16x128xf32>
    %c0_55 = arith.constant 0 : index
    %c0_56 = arith.constant 0 : index
    %101 = vector.load %arg11[%c0_55, %c0_56] : memref<16x128xf32, #tpu.memory_space<vmem>>, vector<16x128xf32>
    tpu.vector_store %arg11[%c0_55, %c0_56], %100 {strides = array<i32>} : memref<16x128xf32, #tpu.memory_space<vmem>>, vector<16x128xf32>,
    %c0_i32_57 = arith.constant 0 : i32
    %102 = arith.cmpi eq, %arg1, %c0_i32_57 : i32
    %103 = arith.extui %102 : i1 to i32
    %c0_i32_58 = arith.constant 0 : i32
    %104 = arith.cmpi ne, %103, %c0_i32_58 : i32
    scf.if %104 {
      %c0_59 = arith.constant 0 : index
      %c0_60 = arith.constant 0 : index
      %105 = vector.load %arg10[%c0_59, %c0_60] : memref<16x128xf32, #tpu.memory_space<vmem>>, vector<16x128xf32>
      %106 = vector.shape_cast %105 : vector<16x128xf32> to vector<1x16x128xf32>
      %cst_61 = arith.constant dense<0.000000e+00> : vector<1xf32>
      %107 = vector.multi_reduction <add>, %106, %cst_61 [1, 2] : vector<1x16x128xf32> to vector<1xf32>
      %108 = vector.shape_cast %107 : vector<1xf32> to vector<1x1x1xf32>
      %109 = vector.extract %108[0, 0, 0] : f32 from vector<1x1x1xf32>
      %c0_62 = arith.constant 0 : index
      %c0_63 = arith.constant 0 : index
      %110 = vector.load %arg11[%c0_62, %c0_63] : memref<16x128xf32, #tpu.memory_space<vmem>>, vector<16x128xf32>
      %111 = vector.shape_cast %110 : vector<16x128xf32> to vector<1x16x128xf32>
      %cst_64 = arith.constant dense<0.000000e+00> : vector<1xf32>
      %112 = vector.multi_reduction <add>, %111, %cst_64 [1, 2] : vector<1x16x128xf32> to vector<1xf32>
      %113 = vector.shape_cast %112 : vector<1xf32> to vector<1x1x1xf32>
      %114 = vector.extract %113[0, 0, 0] : f32 from vector<1x1x1xf32>
      %115 = tpu.iota {dimensions = array<i32: 0>} : vector<8x128xi32>
      %116 = tpu.iota {dimensions = array<i32: 1>} : vector<8x128xi32>
      %c0_i32_65 = arith.constant 0 : i32
      %117 = vector.broadcast %c0_i32_65 : i32 to vector<8x128xi32>
      %118 = arith.cmpi eq, %115, %117 : vector<8x128xi32>
      %c0_i32_66 = arith.constant 0 : i32
      %119 = vector.broadcast %c0_i32_66 : i32 to vector<8x128xi32>
      %120 = arith.cmpi eq, %116, %119 : vector<8x128xi32>
      %121 = arith.andi %118, %120 : vector<8x128xi1>
      %cst_67 = arith.constant 0.000000e+00 : f32
      %122 = vector.broadcast %109 : f32 to vector<8x128xf32>
      %123 = vector.broadcast %cst_67 : f32 to vector<8x128xf32>
      %124 = arith.select %121, %122, %123 : vector<8x128xi1>, vector<8x128xf32>
      %c0_i32_68 = arith.constant 0 : i32
      %125 = vector.broadcast %c0_i32_68 : i32 to vector<8x128xi32>
      %126 = arith.cmpi eq, %115, %125 : vector<8x128xi32>
      %c1_i32_69 = arith.constant 1 : i32
      %127 = vector.broadcast %c1_i32_69 : i32 to vector<8x128xi32>
      %128 = arith.cmpi eq, %116, %127 : vector<8x128xi32>
      %129 = arith.andi %126, %128 : vector<8x128xi1>
      %130 = vector.broadcast %114 : f32 to vector<8x128xf32>
      %131 = arith.select %129, %130, %124 : vector<8x128xi1>, vector<8x128xf32>
      %c0_70 = arith.constant 0 : index
      %c0_71 = arith.constant 0 : index
      %c0_72 = arith.constant 0 : index
      %132 = vector.load %arg7[%c0_70, %c0_71, %c0_72] : memref<1x8x128xf32, #tpu.memory_space<vmem>>, vector<1x8x128xf32>
      %133 = vector.shape_cast %132 : vector<1x8x128xf32> to vector<8x128xf32>
      %134 = vector.shape_cast %131 : vector<8x128xf32> to vector<1x8x128xf32>
      tpu.vector_store %arg7[%c0_70, %c0_71, %c0_72], %134 {strides = array<i32>} : memref<1x8x128xf32, #tpu.memory_space<vmem>>, vector<1x8x128xf32>,
    } else {
    }
    return
  }
  func.func @transform_0(%arg0: i32, %arg1: i32) -> i32 {
    %c0_i32 = arith.constant 0 : i32
    %c0_i32_0 = arith.constant 0 : i32
    return %c0_i32 : i32
  }
  func.func @transform_1(%arg0: i32, %arg1: i32) -> (i32, i32) {
    %c0_i32 = arith.constant 0 : i32
    %c0_i32_0 = arith.constant 0 : i32
    return %arg1, %c0_i32 : i32, i32
  }
  func.func @transform_2(%arg0: i32, %arg1: i32) -> (i32, i32, i32) {
    %c0_i32 = arith.constant 0 : i32
    %c0_i32_0 = arith.constant 0 : i32
    %c0_i32_1 = arith.constant 0 : i32
    return %arg0, %c0_i32, %c0_i32_0 : i32, i32, i32
  }
  func.func @transform_3(%arg0: i32, %arg1: i32) -> (i32, i32) {
    %c0_i32 = arith.constant 0 : i32
    %c0_i32_0 = arith.constant 0 : i32
    %c0_i32_1 = arith.constant 0 : i32
    return %c0_i32, %c0_i32_0 : i32, i32
  }
  func.func @transform_4(%arg0: i32, %arg1: i32) -> (i32, i32, i32) {
    %c0_i32 = arith.constant 0 : i32
    %c0_i32_0 = arith.constant 0 : i32
    return %arg0, %arg1, %c0_i32 : i32, i32, i32
  }
  func.func @transform_5(%arg0: i32, %arg1: i32) -> (i32, i32, i32) {
    %c0_i32 = arith.constant 0 : i32
    %c0_i32_0 = arith.constant 0 : i32
    %c0_i32_1 = arith.constant 0 : i32
    return %arg0, %c0_i32, %c0_i32_0 : i32, i32, i32
  }
}

</mosaic_0001>

<llo_original>
// kernel: neg.4
$region0: #{neg.4}
  #allocation0 [shape = 's32[1]{0}', space=sflag, size = 0x4, scoped, tag = 'scoped memory for neg.4']
  %s0 = inlined_call_operand.vmem [shape: f32[8], index: 0, kind: input, shape index: {}]
  %s1 = inlined_call_operand.vmem [shape: f32[8], index: 1, kind: output, shape index: {}]
  %v2 = vld [vmem:[%s0] sm:$0x1]
  %3 = xla_tuple %v2
  %4 = xla_tuple %3
  %v5 = vxor.u32 %v2, 2147483648
  %6 = xla_tuple %v5
  %7 = vst [vmem:[%s1] sm:$0x1] %v5

// kernel: criterion_ohem_cross_entropy.2
$region0: #{criterion_ohem_cross_entropy.2}
  #allocation0 [shape = 'u32[]', space=smem, size = 0x4, offset = 0x4, fixed_abs, tag = 'smem constant byte address 0x4 - core index']
  #allocation1 [shape = 'u32[144,128]{1,0:T(1,128)}', space=vmem, size = 0x12000, scoped, tag = 'internal scratch']
  %s0 = inlined_call_operand.vmem [shape: f32[2,8], index: 0, kind: input, shape index: {}]
  %s1 = inlined_call_operand.vmem [shape: f32[80,8], index: 1, kind: input, shape index: {}]
  %s2 = inlined_call_operand.vmem [shape: f32[8,128], index: 2, kind: input, shape index: {}]
  %s3 = inlined_call_operand.vmem [shape: f32[10,2,128], index: 3, kind: output, shape index: {}]
  %s4 = sld [smem:[#allocation0]]
  $region22: #{criterion_ohem_cross_entropy.2} parent=0
    _
  %s6 = ssub.s32 1, %s4
  %s7 = scalar_select 0, %s6, %s4
  // Predicated region
  $region2: #{criterion_ohem_cross_entropy.2} parent=0 // pred_check
    _
  $region3: #{criterion_ohem_cross_entropy.2} parent=0 // pred_check_branch
    %9 = sbr.rel (0) target = $region5
  $region4: #{criterion_ohem_cross_entropy.2} parent=0 // pred_region
    _
  $region5: #{criterion_ohem_cross_entropy.2} parent=0 // pred_fallthru
    _
  // Predicated region
  $region6: #{criterion_ohem_cross_entropy.2} parent=0 // pred_check
    _
  $region7: #{criterion_ohem_cross_entropy.2} parent=0 // pred_check_branch
    %11 = sbr.rel (0) target = $region9
  $region8: #{criterion_ohem_cross_entropy.2} parent=0 // pred_region
    _
  $region9: #{criterion_ohem_cross_entropy.2} parent=0 // pred_fallthru
    _
  // Predicated region
  $region10: #{criterion_ohem_cross_entropy.2} parent=0 // pred_check
    _
  $region11: #{criterion_ohem_cross_entropy.2} parent=0 // pred_check_branch
    %13 = sbr.rel (0) target = $region13
  $region12: #{criterion_ohem_cross_entropy.2} parent=0 // pred_region
    _
  $region13: #{criterion_ohem_cross_entropy.2} parent=0 // pred_fallthru
    _
  %v14 = vld [vmem:[%s0] sm:$0x3]
  %v15 = vld [vmem:[%s1] sm:$0xff]
  %v16 = vld [vmem:[%s1 + $0x8] sm:$0xff]
  %v17 = vld [vmem:[%s1 + $0x10] sm:$0xff]
  %v18 = vld [vmem:[%s1 + $0x18] sm:$0xff]
  %v19 = vld [vmem:[%s1 + $0x20] sm:$0xff]
  %v20 = vld [vmem:[%s1 + $0x28] sm:$0xff]
  %v21 = vld [vmem:[%s1 + $0x30] sm:$0xff]
  %v22 = vld [vmem:[%s1 + $0x38] sm:$0xff]
  %v23 = vld [vmem:[%s1 + $0x40] sm:$0xff]
  %v24 = vld [vmem:[%s1 + $0x48] sm:$0xff]
  %v25 = vld [vmem:[%s2] sm:$0xff]
  %vm26 = vcmask 64512
  %v28 = vsel %vm26, %v15, 0
  %v31 = vsel %vm26, %v16, 0
  %v34 = vsel %vm26, %v17, 0
  %v37 = vsel %vm26, %v18, 0
  %v40 = vsel %vm26, %v19, 0
  %v43 = vsel %vm26, %v20, 0
  %v46 = vsel %vm26, %v21, 0
  %v49 = vsel %vm26, %v22, 0
  %v52 = vsel %vm26, %v23, 0
  %v55 = vsel %vm26, %v24, 0
  %57 = vmatprep.subr.mxu0 0.0
  %58 = vmatpush1.msra.mxu0 %v25
  %59 = vmatprep.subr.mxu0 0.0
  %60 = vmatpush1.msra.mxu0 0.0
  %61 = vmatprep.subr.mxu0 0.0
  %62 = vmatpush1.msra.mxu0 0.0
  %63 = vmatprep.subr.mxu0 0.0
  %64 = vmatpush1.msra.mxu0 0.0
  %65 = vmatprep.subr.mxu0 0.0
  %66 = vmatpush1.msra.mxu0 0.0
  %67 = vmatprep.subr.mxu0 0.0
  %68 = vmatpush1.msra.mxu0 0.0
  %69 = vmatprep.subr.mxu0 0.0
  %70 = vmatpush1.msra.mxu0 0.0
  %71 = vmatprep.subr.mxu0 0.0
  %72 = vmatpush1.msra.mxu0 0.0
  %73 = vmatprep.subr.mxu0 0.0
  %74 = vmatpush1.msra.mxu0 0.0
  %75 = vmatprep.subr.mxu0 0.0
  %76 = vmatpush1.msra.mxu0 0.0
  %77 = vmatprep.subr.mxu0 0.0
  %78 = vmatpush1.msra.mxu0 0.0
  %79 = vmatprep.subr.mxu0 0.0
  %80 = vmatpush1.msra.mxu0 0.0
  %81 = vmatprep.subr.mxu0 0.0
  %82 = vmatpush1.msra.mxu0 0.0
  %83 = vmatprep.subr.mxu0 0.0
  %84 = vmatpush1.msra.mxu0 0.0
  %85 = vmatprep.subr.mxu0 0.0
  %86 = vmatpush1.msra.mxu0 0.0
  %87 = vmatprep.subr.mxu0 0.0
  %88 = vmatpush1.msra.mxu0 0.0
  %89 = vmatprep.subr.mxu0 0.0
  %90 = vmatpush1.msra.mxu0 0.0
  %91 = vmatprep.subr.mxu0 0.0
  %92 = vmatpush1.msra.mxu0 0.0
  %93 = vmatprep.subr.mxu0 0.0
  %94 = vmatpush1.msra.mxu0 0.0
  %95 = vmatprep.subr.mxu0 0.0
  %96 = vmatpush1.msra.mxu0 0.0
  %97 = vmatprep.subr.mxu0 0.0
  %98 = vmatpush1.msra.mxu0 0.0
  %99 = vmatprep.subr.mxu0 0.0
  %100 = vmatpush1.msra.mxu0 0.0
  %101 = vmatprep.subr.mxu0 0.0
  %102 = vmatpush1.msra.mxu0 0.0
  %103 = vmatprep.subr.mxu0 0.0
  %104 = vmatpush1.msra.mxu0 0.0
  %105 = vmatprep.subr.mxu0 0.0
  %106 = vmatpush1.msra.mxu0 0.0
  %107 = vmatprep.subr.mxu0 0.0
  %108 = vmatpush1.msra.mxu0 0.0
  %109 = vmatprep.subr.mxu0 0.0
  %110 = vmatpush1.msra.mxu0 0.0
  %111 = vmatprep.subr.mxu0 0.0
  %112 = vmatpush1.msra.mxu0 0.0
  %113 = vmatprep.subr.mxu0 0.0
  %114 = vmatpush1.msra.mxu0 0.0
  %115 = vmatprep.subr.mxu0 0.0
  %116 = vmatpush1.msra.mxu0 0.0
  %117 = vmatprep.subr.mxu0 0.0
  %118 = vmatpush1.msra.mxu0 0.0
  %119 = vmatprep.subr.mxu0 0.0
  %120 = vmatpush1.msra.mxu0 0.0
  %121 = vmatprep.mubr.f32.mxu0 0.0
  %122 = vmatmul.mubr.f32.gmra.mrb[0].mxu0 %v28
  %v123 = vpop.f32.mrb[0].mxu0
  %v124 = vadd.f32 0.0, %v123
  %v125 = vpop.f32.mrb[0].mxu0
  %126 = vmatprep.mubr.f32.mxu0 0.0
  %127 = vmatmul.mubr.f32.gmra.mrb[0].mxu0 %v31
  %v128 = vpop.f32.mrb[0].mxu0
  %v129 = vadd.f32 0.0, %v128
  %v130 = vpop.f32.mrb[0].mxu0
  %131 = vmatprep.mubr.f32.mxu0 0.0
  %132 = vmatmul.mubr.f32.gmra.mrb[0].mxu0 %v34
  %v133 = vpop.f32.mrb[0].mxu0
  %v134 = vadd.f32 0.0, %v133
  %v135 = vpop.f32.mrb[0].mxu0
  %136 = vmatprep.mubr.f32.mxu0 0.0
  %137 = vmatmul.mubr.f32.gmra.mrb[0].mxu0 %v37
  %v138 = vpop.f32.mrb[0].mxu0
  %v139 = vadd.f32 0.0, %v138
  %v140 = vpop.f32.mrb[0].mxu0
  %141 = vmatprep.mubr.f32.mxu0 0.0
  %142 = vmatmul.mubr.f32.gmra.mrb[0].mxu0 %v40
  %v143 = vpop.f32.mrb[0].mxu0
  %v144 = vadd.f32 0.0, %v143
  %v145 = vpop.f32.mrb[0].mxu0
  %146 = vmatprep.mubr.f32.mxu0 0.0
  %147 = vmatmul.mubr.f32.gmra.mrb[0].mxu0 %v43
  %v148 = vpop.f32.mrb[0].mxu0
  %v149 = vadd.f32 0.0, %v148
  %v150 = vpop.f32.mrb[0].mxu0
  %151 = vmatprep.mubr.f32.mxu0 0.0
  %152 = vmatmul.mubr.f32.gmra.mrb[0].mxu0 %v46
  %v153 = vpop.f32.mrb[0].mxu0
  %v154 = vadd.f32 0.0, %v153
  %v155 = vpop.f32.mrb[0].mxu0
  %156 = vmatprep.mubr.f32.mxu0 0.0
  %157 = vmatmul.mubr.f32.gmra.mrb[0].mxu0 %v49
  %v158 = vpop.f32.mrb[0].mxu0
  %v159 = vadd.f32 0.0, %v158
  %v160 = vpop.f32.mrb[0].mxu0
  %161 = vmatprep.mubr.f32.mxu0 0.0
  %162 = vmatmul.mubr.f32.gmra.mrb[0].mxu0 %v52
  %v163 = vpop.f32.mrb[0].mxu0
  %v164 = vadd.f32 0.0, %v163
  %v165 = vpop.f32.mrb[0].mxu0
  %166 = vmatprep.mubr.f32.mxu0 0.0
  %167 = vmatmul.mubr.f32.gmra.mrb[0].mxu0 %v55
  %v168 = vpop.f32.mrb[0].mxu0
  %v169 = vadd.f32 0.0, %v168
  %v170 = vpop.f32.mrb[0].mxu0
  %171 = vdwg.mxu0
  %v173 = vsel %vm26, %v14, 0
  %175 = vmatprep.subr.mxu0 0.0
  %176 = vmatpush1.msra.mxu0 %v124
  %177 = vmatprep.subr.mxu0 0.0
  %178 = vmatpush1.msra.mxu0 0.0
  %179 = vmatprep.subr.mxu0 0.0
  %180 = vmatpush1.msra.mxu0 0.0
  %181 = vmatprep.subr.mxu0 0.0
  %182 = vmatpush1.msra.mxu0 0.0
  %183 = vmatprep.subr.mxu0 0.0
  %184 = vmatpush1.msra.mxu0 0.0
  %185 = vmatprep.subr.mxu0 0.0
  %186 = vmatpush1.msra.mxu0 0.0
  %187 = vmatprep.subr.mxu0 0.0
  %188 = vmatpush1.msra.mxu0 0.0
  %189 = vmatprep.subr.mxu0 0.0
  %190 = vmatpush1.msra.mxu0 0.0
  %191 = vmatprep.subr.mxu0 0.0
  %192 = vmatpush1.msra.mxu0 0.0
  %193 = vmatprep.subr.mxu0 0.0
  %194 = vmatpush1.msra.mxu0 0.0
  %195 = vmatprep.subr.mxu0 0.0
  %196 = vmatpush1.msra.mxu0 0.0
  %197 = vmatprep.subr.mxu0 0.0
  %198 = vmatpush1.msra.mxu0 0.0
  %199 = vmatprep.subr.mxu0 0.0
  %200 = vmatpush1.msra.mxu0 0.0
  %201 = vmatprep.subr.mxu0 0.0
  %202 = vmatpush1.msra.mxu0 0.0
  %203 = vmatprep.subr.mxu0 0.0
  %204 = vmatpush1.msra.mxu0 0.0
  %205 = vmatprep.subr.mxu0 0.0
  %206 = vmatpush1.msra.mxu0 0.0
  %207 = vmatprep.subr.mxu0 0.0
  %208 = vmatpush1.msra.mxu0 0.0
  %209 = vmatprep.subr.mxu0 0.0
  %210 = vmatpush1.msra.mxu0 0.0
  %211 = vmatprep.subr.mxu0 0.0
  %212 = vmatpush1.msra.mxu0 0.0
  %213 = vmatprep.subr.mxu0 0.0
  %214 = vmatpush1.msra.mxu0 0.0
  %215 = vmatprep.subr.mxu0 0.0
  %216 = vmatpush1.msra.mxu0 0.0
  %217 = vmatprep.subr.mxu0 0.0
  %218 = vmatpush1.msra.mxu0 0.0
  %219 = vmatprep.subr.mxu0 0.0
  %220 = vmatpush1.msra.mxu0 0.0
  %221 = vmatprep.subr.mxu0 0.0
  %222 = vmatpush1.msra.mxu0 0.0
  %223 = vmatprep.subr.mxu0 0.0
  %224 = vmatpush1.msra.mxu0 0.0
  %225 = vmatprep.subr.mxu0 0.0
  %226 = vmatpush1.msra.mxu0 0.0
  %227 = vmatprep.subr.mxu0 0.0
  %228 = vmatpush1.msra.mxu0 0.0
  %229 = vmatprep.subr.mxu0 0.0
  %230 = vmatpush1.msra.mxu0 0.0
  %231 = vmatprep.subr.mxu0 0.0
  %232 = vmatpush1.msra.mxu0 0.0
  %233 = vmatprep.subr.mxu0 0.0
  %234 = vmatpush1.msra.mxu0 0.0
  %235 = vmatprep.subr.mxu0 0.0
  %236 = vmatpush1.msra.mxu0 0.0
  %237 = vmatprep.subr.mxu0 0.0
  %238 = vmatpush1.msra.mxu0 0.0
  %239 = vmatprep.mubr.f32.mxu0 0.0
  %240 = vmatmul.mubr.f32.gmra.mrb[0].mxu0 %v173
  %v241 = vpop.f32.mrb[0].mxu0
  %v242 = vadd.f32 0.0, %v241
  %v243 = vpop.f32.mrb[0].mxu0
  %244 = vdwg.mxu0
  %245 = vst [vmem:[%s3] sm:$0x3] %v242
  %246 = vmatprep.subr.mxu0 0.0
  %247 = vmatpush1.msra.mxu0 %v129
  %248 = vmatprep.subr.mxu0 0.0
  %249 = vmatpush1.msra.mxu0 0.0
  %250 = vmatprep.subr.mxu0 0.0
  %251 = vmatpush1.msra.mxu0 0.0
  %252 = vmatprep.subr.mxu0 0.0
  %253 = vmatpush1.msra.mxu0 0.0
  %254 = vmatprep.subr.mxu0 0.0
  %255 = vmatpush1.msra.mxu0 0.0
  %256 = vmatprep.subr.mxu0 0.0
  %257 = vmatpush1.msra.mxu0 0.0
  %258 = vmatprep.subr.mxu0 0.0
  %259 = vmatpush1.msra.mxu0 0.0
  %260 = vmatprep.subr.mxu0 0.0
  %261 = vmatpush1.msra.mxu0 0.0
  %262 = vmatprep.subr.mxu0 0.0
  %263 = vmatpush1.msra.mxu0 0.0
  %264 = vmatprep.subr.mxu0 0.0
  %265 = vmatpush1.msra.mxu0 0.0
  %266 = vmatprep.subr.mxu0 0.0
  %267 = vmatpush1.msra.mxu0 0.0
  %268 = vmatprep.subr.mxu0 0.0
  %269 = vmatpush1.msra.mxu0 0.0
  %270 = vmatprep.subr.mxu0 0.0
  %271 = vmatpush1.msra.mxu0 0.0
  %272 = vmatprep.subr.mxu0 0.0
  %273 = vmatpush1.msra.mxu0 0.0
  %274 = vmatprep.subr.mxu0 0.0
  %275 = vmatpush1.msra.mxu0 0.0
  %276 = vmatprep.subr.mxu0 0.0
  %277 = vmatpush1.msra.mxu0 0.0
  %278 = vmatprep.subr.mxu0 0.0
  %279 = vmatpush1.msra.mxu0 0.0
  %280 = vmatprep.subr.mxu0 0.0
  %281 = vmatpush1.msra.mxu0 0.0
  %282 = vmatprep.subr.mxu0 0.0
  %283 = vmatpush1.msra.mxu0 0.0
  %284 = vmatprep.subr.mxu0 0.0
  %285 = vmatpush1.msra.mxu0 0.0
  %286 = vmatprep.subr.mxu0 0.0
  %287 = vmatpush1.msra.mxu0 0.0
  %288 = vmatprep.subr.mxu0 0.0
  %289 = vmatpush1.msra.mxu0 0.0
  %290 = vmatprep.subr.mxu0 0.0
  %291 = vmatpush1.msra.mxu0 0.0
  %292 = vmatprep.subr.mxu0 0.0
  %293 = vmatpush1.msra.mxu0 0.0
  %294 = vmatprep.subr.mxu0 0.0
  %295 = vmatpush1.msra.mxu0 0.0
  %296 = vmatprep.subr.mxu0 0.0
  %297 = vmatpush1.msra.mxu0 0.0
  %298 = vmatprep.subr.mxu0 0.0
  %299 = vmatpush1.msra.mxu0 0.0
  %300 = vmatprep.subr.mxu0 0.0
  %301 = vmatpush1.msra.mxu0 0.0
  %302 = vmatprep.subr.mxu0 0.0
  %303 = vmatpush1.msra.mxu0 0.0
  %304 = vmatprep.subr.mxu0 0.0
  %305 = vmatpush1.msra.mxu0 0.0
  %306 = vmatprep.subr.mxu0 0.0
  %307 = vmatpush1.msra.mxu0 0.0
  %308 = vmatprep.subr.mxu0 0.0
  %309 = vmatpush1.msra.mxu0 0.0
  %310 = vmatprep.mubr.f32.mxu0 0.0
  %311 = vmatmul.mubr.f32.gmra.mrb[0].mxu0 %v173
  %v312 = vpop.f32.mrb[0].mxu0
  %v313 = vadd.f32 0.0, %v312
  %v314 = vpop.f32.mrb[0].mxu0
  %315 = vdwg.mxu0
  %s316 = scalar_lea.vmem %s3, 2
  %317 = vst [vmem:[%s316] sm:$0x3] %v313
  %318 = vmatprep.subr.mxu0 0.0
  %319 = vmatpush1.msra.mxu0 %v134
  %320 = vmatprep.subr.mxu0 0.0
  %321 = vmatpush1.msra.mxu0 0.0
  %322 = vmatprep.subr.mxu0 0.0
  %323 = vmatpush1.msra.mxu0 0.0
  %324 = vmatprep.subr.mxu0 0.0
  %325 = vmatpush1.msra.mxu0 0.0
  %326 = vmatprep.subr.mxu0 0.0
  %327 = vmatpush1.msra.mxu0 0.0
  %328 = vmatprep.subr.mxu0 0.0
  %329 = vmatpush1.msra.mxu0 0.0
  %330 = vmatprep.subr.mxu0 0.0
  %331 = vmatpush1.msra.mxu0 0.0
  %332 = vmatprep.subr.mxu0 0.0
  %333 = vmatpush1.msra.mxu0 0.0
  %334 = vmatprep.subr.mxu0 0.0
  %335 = vmatpush1.msra.mxu0 0.0
  %336 = vmatprep.subr.mxu0 0.0
  %337 = vmatpush1.msra.mxu0 0.0
  %338 = vmatprep.subr.mxu0 0.0
  %339 = vmatpush1.msra.mxu0 0.0
  %340 = vmatprep.subr.mxu0 0.0
  %341 = vmatpush1.msra.mxu0 0.0
  %342 = vmatprep.subr.mxu0 0.0
  %343 = vmatpush1.msra.mxu0 0.0
  %344 = vmatprep.subr.mxu0 0.0
  %345 = vmatpush1.msra.mxu0 0.0
  %346 = vmatprep.subr.mxu0 0.0
  %347 = vmatpush1.msra.mxu0 0.0
  %348 = vmatprep.subr.mxu0 0.0
  %349 = vmatpush1.msra.mxu0 0.0
  %350 = vmatprep.subr.mxu0 0.0
  %351 = vmatpush1.msra.mxu0 0.0
  %352 = vmatprep.subr.mxu0 0.0
  %353 = vmatpush1.msra.mxu0 0.0
  %354 = vmatprep.subr.mxu0 0.0
  %355 = vmatpush1.msra.mxu0 0.0
  %356 = vmatprep.subr.mxu0 0.0
  %357 = vmatpush1.msra.mxu0 0.0
  %358 = vmatprep.subr.mxu0 0.0
  %359 = vmatpush1.msra.mxu0 0.0
  %360 = vmatprep.subr.mxu0 0.0
  %361 = vmatpush1.msra.mxu0 0.0
  %362 = vmatprep.subr.mxu0 0.0
  %363 = vmatpush1.msra.mxu0 0.0
  %364 = vmatprep.subr.mxu0 0.0
  %365 = vmatpush1.msra.mxu0 0.0
  %366 = vmatprep.subr.mxu0 0.0
  %367 = vmatpush1.msra.mxu0 0.0
  %368 = vmatprep.subr.mxu0 0.0
  %369 = vmatpush1.msra.mxu0 0.0
  %370 = vmatprep.subr.mxu0 0.0
  %371 = vmatpush1.msra.mxu0 0.0
  %372 = vmatprep.subr.mxu0 0.0
  %373 = vmatpush1.msra.mxu0 0.0
  %374 = vmatprep.subr.mxu0 0.0
  %375 = vmatpush1.msra.mxu0 0.0
  %376 = vmatprep.subr.mxu0 0.0
  %377 = vmatpush1.msra.mxu0 0.0
  %378 = vmatprep.subr.mxu0 0.0
  %379 = vmatpush1.msra.mxu0 0.0
  %380 = vmatprep.subr.mxu0 0.0
  %381 = vmatpush1.msra.mxu0 0.0
  %382 = vmatprep.mubr.f32.mxu0 0.0
  %383 = vmatmul.mubr.f32.gmra.mrb[0].mxu0 %v173
  %v384 = vpop.f32.mrb[0].mxu0
  %v385 = vadd.f32 0.0, %v384
  %v386 = vpop.f32.mrb[0].mxu0
  %387 = vdwg.mxu0
  %s388 = scalar_lea.vmem %s3, 4
  %389 = vst [vmem:[%s388] sm:$0x3] %v385
  %390 = vmatprep.subr.mxu0 0.0
  %391 = vmatpush1.msra.mxu0 %v139
  %392 = vmatprep.subr.mxu0 0.0
  %393 = vmatpush1.msra.mxu0 0.0
  %394 = vmatprep.subr.mxu0 0.0
  %395 = vmatpush1.msra.mxu0 0.0
  %396 = vmatprep.subr.mxu0 0.0
  %397 = vmatpush1.msra.mxu0 0.0
  %398 = vmatprep.subr.mxu0 0.0
  %399 = vmatpush1.msra.mxu0 0.0
  %400 = vmatprep.subr.mxu0 0.0
  %401 = vmatpush1.msra.mxu0 0.0
  %402 = vmatprep.subr.mxu0 0.0
  %403 = vmatpush1.msra.mxu0 0.0
  %404 = vmatprep.subr.mxu0 0.0
  %405 = vmatpush1.msra.mxu0 0.0
  %406 = vmatprep.subr.mxu0 0.0
  %407 = vmatpush1.msra.mxu0 0.0
  %408 = vmatprep.subr.mxu0 0.0
  %409 = vmatpush1.msra.mxu0 0.0
  %410 = vmatprep.subr.mxu0 0.0
  %411 = vmatpush1.msra.mxu0 0.0
  %412 = vmatprep.subr.mxu0 0.0
  %413 = vmatpush1.msra.mxu0 0.0
  %414 = vmatprep.subr.mxu0 0.0
  %415 = vmatpush1.msra.mxu0 0.0
  %416 = vmatprep.subr.mxu0 0.0
  %417 = vmatpush1.msra.mxu0 0.0
  %418 = vmatprep.subr.mxu0 0.0
  %419 = vmatpush1.msra.mxu0 0.0
  %420 = vmatprep.subr.mxu0 0.0
  %421 = vmatpush1.msra.mxu0 0.0
  %422 = vmatprep.subr.mxu0 0.0
  %423 = vmatpush1.msra.mxu0 0.0
  %424 = vmatprep.subr.mxu0 0.0
  %425 = vmatpush1.msra.mxu0 0.0
  %426 = vmatprep.subr.mxu0 0.0
  %427 = vmatpush1.msra.mxu0 0.0
  %428 = vmatprep.subr.mxu0 0.0
  %429 = vmatpush1.msra.mxu0 0.0
  %430 = vmatprep.subr.mxu0 0.0
  %431 = vmatpush1.msra.mxu0 0.0
  %432 = vmatprep.subr.mxu0 0.0
  %433 = vmatpush1.msra.mxu0 0.0
  %434 = vmatprep.subr.mxu0 0.0
  %435 = vmatpush1.msra.mxu0 0.0
  %436 = vmatprep.subr.mxu0 0.0
  %437 = vmatpush1.msra.mxu0 0.0
  %438 = vmatprep.subr.mxu0 0.0
  %439 = vmatpush1.msra.mxu0 0.0
  %440 = vmatprep.subr.mxu0 0.0
  %441 = vmatpush1.msra.mxu0 0.0
  %442 = vmatprep.subr.mxu0 0.0
  %443 = vmatpush1.msra.mxu0 0.0
  %444 = vmatprep.subr.mxu0 0.0
  %445 = vmatpush1.msra.mxu0 0.0
  %446 = vmatprep.subr.mxu0 0.0
  %447 = vmatpush1.msra.mxu0 0.0
  %448 = vmatprep.subr.mxu0 0.0
  %449 = vmatpush1.msra.mxu0 0.0
  %450 = vmatprep.subr.mxu0 0.0
  %451 = vmatpush1.msra.mxu0 0.0
  %452 = vmatprep.subr.mxu0 0.0
  %453 = vmatpush1.msra.mxu0 0.0
  %454 = vmatprep.mubr.f32.mxu0 0.0
  %455 = vmatmul.mubr.f32.gmra.mrb[0].mxu0 %v173
  %v456 = vpop.f32.mrb[0].mxu0
  %v457 = vadd.f32 0.0, %v456
  %v458 = vpop.f32.mrb[0].mxu0
  %459 = vdwg.mxu0
  %s460 = scalar_lea.vmem %s3, 6
  %461 = vst [vmem:[%s460] sm:$0x3] %v457
  %462 = vmatprep.subr.mxu0 0.0
  %463 = vmatpush1.msra.mxu0 %v144
  %464 = vmatprep.subr.mxu0 0.0
  %465 = vmatpush1.msra.mxu0 0.0
  %466 = vmatprep.subr.mxu0 0.0
  %467 = vmatpush1.msra.mxu0 0.0
  %468 = vmatprep.subr.mxu0 0.0
  %469 = vmatpush1.msra.mxu0 0.0
  %470 = vmatprep.subr.mxu0 0.0
  %471 = vmatpush1.msra.mxu0 0.0
  %472 = vmatprep.subr.mxu0 0.0
  %473 = vmatpush1.msra.mxu0 0.0
  %474 = vmatprep.subr.mxu0 0.0
  %475 = vmatpush1.msra.mxu0 0.0
  %476 = vmatprep.subr.mxu0 0.0
  %477 = vmatpush1.msra.mxu0 0.0
  %478 = vmatprep.subr.mxu0 0.0
  %479 = vmatpush1.msra.mxu0 0.0
  %480 = vmatprep.subr.mxu0 0.0
  %481 = vmatpush1.msra.mxu0 0.0
  %482 = vmatprep.subr.mxu0 0.0
  %483 = vmatpush1.msra.mxu0 0.0
  %484 = vmatprep.subr.mxu0 0.0
  %485 = vmatpush1.msra.mxu0 0.0
  %486 = vmatprep.subr.mxu0 0.0
  %487 = vmatpush1.msra.mxu0 0.0
  %488 = vmatprep.subr.mxu0 0.0
  %489 = vmatpush1.msra.mxu0 0.0
  %490 = vmatprep.subr.mxu0 0.0
  %491 = vmatpush1.msra.mxu0 0.0
  %492 = vmatprep.subr.mxu0 0.0
  %493 = vmatpush1.msra.mxu0 0.0
  %494 = vmatprep.subr.mxu0 0.0
  %495 = vmatpush1.msra.mxu0 0.0
  %496 = vmatprep.subr.mxu0 0.0
  %497 = vmatpush1.msra.mxu0 0.0
  %498 = vmatprep.subr.mxu0 0.0
  %499 = vmatpush1.msra.mxu0 0.0
  %500 = vmatprep.subr.mxu0 0.0
  %501 = vmatpush1.msra.mxu0 0.0
  %502 = vmatprep.subr.mxu0 0.0
  %503 = vmatpush1.msra.mxu0 0.0
  %504 = vmatprep.subr.mxu0 0.0
  %505 = vmatpush1.msra.mxu0 0.0
  %506 = vmatprep.subr.mxu0 0.0
  %507 = vmatpush1.msra.mxu0 0.0
  %508 = vmatprep.subr.mxu0 0.0
  %509 = vmatpush1.msra.mxu0 0.0
  %510 = vmatprep.subr.mxu0 0.0
  %511 = vmatpush1.msra.mxu0 0.0
  %512 = vmatprep.subr.mxu0 0.0
  %513 = vmatpush1.msra.mxu0 0.0
  %514 = vmatprep.subr.mxu0 0.0
  %515 = vmatpush1.msra.mxu0 0.0
  %516 = vmatprep.subr.mxu0 0.0
  %517 = vmatpush1.msra.mxu0 0.0
  %518 = vmatprep.subr.mxu0 0.0
  %519 = vmatpush1.msra.mxu0 0.0
  %520 = vmatprep.subr.mxu0 0.0
  %521 = vmatpush1.msra.mxu0 0.0
  %522 = vmatprep.subr.mxu0 0.0
  %523 = vmatpush1.msra.mxu0 0.0
  %524 = vmatprep.subr.mxu0 0.0
  %525 = vmatpush1.msra.mxu0 0.0
  %526 = vmatprep.mubr.f32.mxu0 0.0
  %527 = vmatmul.mubr.f32.gmra.mrb[0].mxu0 %v173
  %v528 = vpop.f32.mrb[0].mxu0
  %v529 = vadd.f32 0.0, %v528
  %v530 = vpop.f32.mrb[0].mxu0
  %531 = vdwg.mxu0
  %s532 = scalar_lea.vmem %s3, 8
  %533 = vst [vmem:[%s532] sm:$0x3] %v529
  %534 = vmatprep.subr.mxu0 0.0
  %535 = vmatpush1.msra.mxu0 %v149
  %536 = vmatprep.subr.mxu0 0.0
  %537 = vmatpush1.msra.mxu0 0.0
  %538 = vmatprep.subr.mxu0 0.0
  %539 = vmatpush1.msra.mxu0 0.0
  %540 = vmatprep.subr.mxu0 0.0
  %541 = vmatpush1.msra.mxu0 0.0
  %542 = vmatprep.subr.mxu0 0.0
  %543 = vmatpush1.msra.mxu0 0.0
  %544 = vmatprep.subr.mxu0 0.0
  %545 = vmatpush1.msra.mxu0 0.0
  %546 = vmatprep.subr.mxu0 0.0
  %547 = vmatpush1.msra.mxu0 0.0
  %548 = vmatprep.subr.mxu0 0.0
  %549 = vmatpush1.msra.mxu0 0.0
  %550 = vmatprep.subr.mxu0 0.0
  %551 = vmatpush1.msra.mxu0 0.0
  %552 = vmatprep.subr.mxu0 0.0
  %553 = vmatpush1.msra.mxu0 0.0
  %554 = vmatprep.subr.mxu0 0.0
  %555 = vmatpush1.msra.mxu0 0.0
  %556 = vmatprep.subr.mxu0 0.0
  %557 = vmatpush1.msra.mxu0 0.0
  %558 = vmatprep.subr.mxu0 0.0
  %559 = vmatpush1.msra.mxu0 0.0
  %560 = vmatprep.subr.mxu0 0.0
  %561 = vmatpush1.msra.mxu0 0.0
  %562 = vmatprep.subr.mxu0 0.0
  %563 = vmatpush1.msra.mxu0 0.0
  %564 = vmatprep.subr.mxu0 0.0
  %565 = vmatpush1.msra.mxu0 0.0
  %566 = vmatprep.subr.mxu0 0.0
  %567 = vmatpush1.msra.mxu0 0.0
  %568 = vmatprep.subr.mxu0 0.0
  %569 = vmatpush1.msra.mxu0 0.0
  %570 = vmatprep.subr.mxu0 0.0
  %571 = vmatpush1.msra.mxu0 0.0
  %572 = vmatprep.subr.mxu0 0.0
  %573 = vmatpush1.msra.mxu0 0.0
  %574 = vmatprep.subr.mxu0 0.0
  %575 = vmatpush1.msra.mxu0 0.0
  %576 = vmatprep.subr.mxu0 0.0
  %577 = vmatpush1.msra.mxu0 0.0
  %578 = vmatprep.subr.mxu0 0.0
  %579 = vmatpush1.msra.mxu0 0.0
  %580 = vmatprep.subr.mxu0 0.0
  %581 = vmatpush1.msra.mxu0 0.0
  %582 = vmatprep.subr.mxu0 0.0
  %583 = vmatpush1.msra.mxu0 0.0
  %584 = vmatprep.subr.mxu0 0.0
  %585 = vmatpush1.msra.mxu0 0.0
  %586 = vmatprep.subr.mxu0 0.0
  %587 = vmatpush1.msra.mxu0 0.0
  %588 = vmatprep.subr.mxu0 0.0
  %589 = vmatpush1.msra.mxu0 0.0
  %590 = vmatprep.subr.mxu0 0.0
  %591 = vmatpush1.msra.mxu0 0.0
  %592 = vmatprep.subr.mxu0 0.0
  %593 = vmatpush1.msra.mxu0 0.0
  %594 = vmatprep.subr.mxu0 0.0
  %595 = vmatpush1.msra.mxu0 0.0
  %596 = vmatprep.subr.mxu0 0.0
  %597 = vmatpush1.msra.mxu0 0.0
  %598 = vmatprep.mubr.f32.mxu0 0.0
  %599 = vmatmul.mubr.f32.gmra.mrb[0].mxu0 %v173
  %v600 = vpop.f32.mrb[0].mxu0
  %v601 = vadd.f32 0.0, %v600
  %v602 = vpop.f32.mrb[0].mxu0
  %603 = vdwg.mxu0
  %s604 = scalar_lea.vmem %s3, 10
  %605 = vst [vmem:[%s604] sm:$0x3] %v601
  %606 = vmatprep.subr.mxu0 0.0
  %607 = vmatpush1.msra.mxu0 %v154
  %608 = vmatprep.subr.mxu0 0.0
  %609 = vmatpush1.msra.mxu0 0.0
  %610 = vmatprep.subr.mxu0 0.0
  %611 = vmatpush1.msra.mxu0 0.0
  %612 = vmatprep.subr.mxu0 0.0
  %613 = vmatpush1.msra.mxu0 0.0
  %614 = vmatprep.subr.mxu0 0.0
  %615 = vmatpush1.msra.mxu0 0.0
  %616 = vmatprep.subr.mxu0 0.0
  %617 = vmatpush1.msra.mxu0 0.0
  %618 = vmatprep.subr.mxu0 0.0
  %619 = vmatpush1.msra.mxu0 0.0
  %620 = vmatprep.subr.mxu0 0.0
  %621 = vmatpush1.msra.mxu0 0.0
  %622 = vmatprep.subr.mxu0 0.0
  %623 = vmatpush1.msra.mxu0 0.0
  %624 = vmatprep.subr.mxu0 0.0
  %625 = vmatpush1.msra.mxu0 0.0
  %626 = vmatprep.subr.mxu0 0.0
  %627 = vmatpush1.msra.mxu0 0.0
  %628 = vmatprep.subr.mxu0 0.0
  %629 = vmatpush1.msra.mxu0 0.0
  %630 = vmatprep.subr.mxu0 0.0
  %631 = vmatpush1.msra.mxu0 0.0
  %632 = vmatprep.subr.mxu0 0.0
  %633 = vmatpush1.msra.mxu0 0.0
  %634 = vmatprep.subr.mxu0 0.0
  %635 = vmatpush1.msra.mxu0 0.0
  %636 = vmatprep.subr.mxu0 0.0
  %637 = vmatpush1.msra.mxu0 0.0
  %638 = vmatprep.subr.mxu0 0.0
  %639 = vmatpush1.msra.mxu0 0.0
  %640 = vmatprep.subr.mxu0 0.0
  %641 = vmatpush1.msra.mxu0 0.0
  %642 = vmatprep.subr.mxu0 0.0
  %643 = vmatpush1.msra.mxu0 0.0
  %644 = vmatprep.subr.mxu0 0.0
  %645 = vmatpush1.msra.mxu0 0.0
  %646 = vmatprep.subr.mxu0 0.0
  %647 = vmatpush1.msra.mxu0 0.0
  %648 = vmatprep.subr.mxu0 0.0
  %649 = vmatpush1.msra.mxu0 0.0
  %650 = vmatprep.subr.mxu0 0.0
  %651 = vmatpush1.msra.mxu0 0.0
  %652 = vmatprep.subr.mxu0 0.0
  %653 = vmatpush1.msra.mxu0 0.0
  %654 = vmatprep.subr.mxu0 0.0
  %655 = vmatpush1.msra.mxu0 0.0
  %656 = vmatprep.subr.mxu0 0.0
  %657 = vmatpush1.msra.mxu0 0.0
  %658 = vmatprep.subr.mxu0 0.0
  %659 = vmatpush1.msra.mxu0 0.0
  %660 = vmatprep.subr.mxu0 0.0
  %661 = vmatpush1.msra.mxu0 0.0
  %662 = vmatprep.subr.mxu0 0.0
  %663 = vmatpush1.msra.mxu0 0.0
  %664 = vmatprep.subr.mxu0 0.0
  %665 = vmatpush1.msra.mxu0 0.0
  %666 = vmatprep.subr.mxu0 0.0
  %667 = vmatpush1.msra.mxu0 0.0
  %668 = vmatprep.subr.mxu0 0.0
  %669 = vmatpush1.msra.mxu0 0.0
  %670 = vmatprep.mubr.f32.mxu0 0.0
  %671 = vmatmul.mubr.f32.gmra.mrb[0].mxu0 %v173
  %v672 = vpop.f32.mrb[0].mxu0
  %v673 = vadd.f32 0.0, %v672
  %v674 = vpop.f32.mrb[0].mxu0
  %675 = vdwg.mxu0
  %s676 = scalar_lea.vmem %s3, 12
  %677 = vst [vmem:[%s676] sm:$0x3] %v673
  %678 = vmatprep.subr.mxu0 0.0
  %679 = vmatpush1.msra.mxu0 %v159
  %680 = vmatprep.subr.mxu0 0.0
  %681 = vmatpush1.msra.mxu0 0.0
  %682 = vmatprep.subr.mxu0 0.0
  %683 = vmatpush1.msra.mxu0 0.0
  %684 = vmatprep.subr.mxu0 0.0
  %685 = vmatpush1.msra.mxu0 0.0
  %686 = vmatprep.subr.mxu0 0.0
  %687 = vmatpush1.msra.mxu0 0.0
  %688 = vmatprep.subr.mxu0 0.0
  %689 = vmatpush1.msra.mxu0 0.0
  %690 = vmatprep.subr.mxu0 0.0
  %691 = vmatpush1.msra.mxu0 0.0
  %692 = vmatprep.subr.mxu0 0.0
  %693 = vmatpush1.msra.mxu0 0.0
  %694 = vmatprep.subr.mxu0 0.0
  %695 = vmatpush1.msra.mxu0 0.0
  %696 = vmatprep.subr.mxu0 0.0
  %697 = vmatpush1.msra.mxu0 0.0
  %698 = vmatprep.subr.mxu0 0.0
  %699 = vmatpush1.msra.mxu0 0.0
  %700 = vmatprep.subr.mxu0 0.0
  %701 = vmatpush1.msra.mxu0 0.0
  %702 = vmatprep.subr.mxu0 0.0
  %703 = vmatpush1.msra.mxu0 0.0
  %704 = vmatprep.subr.mxu0 0.0
  %705 = vmatpush1.msra.mxu0 0.0
  %706 = vmatprep.subr.mxu0 0.0
  %707 = vmatpush1.msra.mxu0 0.0
  %708 = vmatprep.subr.mxu0 0.0
  %709 = vmatpush1.msra.mxu0 0.0
  %710 = vmatprep.subr.mxu0 0.0
  %711 = vmatpush1.msra.mxu0 0.0
  %712 = vmatprep.subr.mxu0 0.0
  %713 = vmatpush1.msra.mxu0 0.0
  %714 = vmatprep.subr.mxu0 0.0
  %715 = vmatpush1.msra.mxu0 0.0
  %716 = vmatprep.subr.mxu0 0.0
  %717 = vmatpush1.msra.mxu0 0.0
  %718 = vmatprep.subr.mxu0 0.0
  %719 = vmatpush1.msra.mxu0 0.0
  %720 = vmatprep.subr.mxu0 0.0
  %721 = vmatpush1.msra.mxu0 0.0
  %722 = vmatprep.subr.mxu0 0.0
  %723 = vmatpush1.msra.mxu0 0.0
  %724 = vmatprep.subr.mxu0 0.0
  %725 = vmatpush1.msra.mxu0 0.0
  %726 = vmatprep.subr.mxu0 0.0
  %727 = vmatpush1.msra.mxu0 0.0
  %728 = vmatprep.subr.mxu0 0.0
  %729 = vmatpush1.msra.mxu0 0.0
  %730 = vmatprep.subr.mxu0 0.0
  %731 = vmatpush1.msra.mxu0 0.0
  %732 = vmatprep.subr.mxu0 0.0
  %733 = vmatpush1.msra.mxu0 0.0
  %734 = vmatprep.subr.mxu0 0.0
  %735 = vmatpush1.msra.mxu0 0.0
  %736 = vmatprep.subr.mxu0 0.0
  %737 = vmatpush1.msra.mxu0 0.0
  %738 = vmatprep.subr.mxu0 0.0
  %739 = vmatpush1.msra.mxu0 0.0
  %740 = vmatprep.subr.mxu0 0.0
  %741 = vmatpush1.msra.mxu0 0.0
  %742 = vmatprep.mubr.f32.mxu0 0.0
  %743 = vmatmul.mubr.f32.gmra.mrb[0].mxu0 %v173
  %v744 = vpop.f32.mrb[0].mxu0
  %v745 = vadd.f32 0.0, %v744
  %v746 = vpop.f32.mrb[0].mxu0
  %747 = vdwg.mxu0
  %s748 = scalar_lea.vmem %s3, 14
  %749 = vst [vmem:[%s748] sm:$0x3] %v745
  %750 = vmatprep.subr.mxu0 0.0
  %751 = vmatpush1.msra.mxu0 %v164
  %752 = vmatprep.subr.mxu0 0.0
  %753 = vmatpush1.msra.mxu0 0.0
  %754 = vmatprep.subr.mxu0 0.0
  %755 = vmatpush1.msra.mxu0 0.0
  %756 = vmatprep.subr.mxu0 0.0
  %757 = vmatpush1.msra.mxu0 0.0
  %758 = vmatprep.subr.mxu0 0.0
  %759 = vmatpush1.msra.mxu0 0.0
  %760 = vmatprep.subr.mxu0 0.0
  %761 = vmatpush1.msra.mxu0 0.0
  %762 = vmatprep.subr.mxu0 0.0
  %763 = vmatpush1.msra.mxu0 0.0
  %764 = vmatprep.subr.mxu0 0.0
  %765 = vmatpush1.msra.mxu0 0.0
  %766 = vmatprep.subr.mxu0 0.0
  %767 = vmatpush1.msra.mxu0 0.0
  %768 = vmatprep.subr.mxu0 0.0
  %769 = vmatpush1.msra.mxu0 0.0
  %770 = vmatprep.subr.mxu0 0.0
  %771 = vmatpush1.msra.mxu0 0.0
  %772 = vmatprep.subr.mxu0 0.0
  %773 = vmatpush1.msra.mxu0 0.0
  %774 = vmatprep.subr.mxu0 0.0
  %775 = vmatpush1.msra.mxu0 0.0
  %776 = vmatprep.subr.mxu0 0.0
  %777 = vmatpush1.msra.mxu0 0.0
  %778 = vmatprep.subr.mxu0 0.0
  %779 = vmatpush1.msra.mxu0 0.0
  %780 = vmatprep.subr.mxu0 0.0
  %781 = vmatpush1.msra.mxu0 0.0
  %782 = vmatprep.subr.mxu0 0.0
  %783 = vmatpush1.msra.mxu0 0.0
  %784 = vmatprep.subr.mxu0 0.0
  %785 = vmatpush1.msra.mxu0 0.0
  %786 = vmatprep.subr.mxu0 0.0
  %787 = vmatpush1.msra.mxu0 0.0
  %788 = vmatprep.subr.mxu0 0.0
  %789 = vmatpush1.msra.mxu0 0.0
  %790 = vmatprep.subr.mxu0 0.0
  %791 = vmatpush1.msra.mxu0 0.0
  %792 = vmatprep.subr.mxu0 0.0
  %793 = vmatpush1.msra.mxu0 0.0
  %794 = vmatprep.subr.mxu0 0.0
  %795 = vmatpush1.msra.mxu0 0.0
  %796 = vmatprep.subr.mxu0 0.0
  %797 = vmatpush1.msra.mxu0 0.0
  %798 = vmatprep.subr.mxu0 0.0
  %799 = vmatpush1.msra.mxu0 0.0
  %800 = vmatprep.subr.mxu0 0.0
  %801 = vmatpush1.msra.mxu0 0.0
  %802 = vmatprep.subr.mxu0 0.0
  %803 = vmatpush1.msra.mxu0 0.0
  %804 = vmatprep.subr.mxu0 0.0
  %805 = vmatpush1.msra.mxu0 0.0
  %806 = vmatprep.subr.mxu0 0.0
  %807 = vmatpush1.msra.mxu0 0.0
  %808 = vmatprep.subr.mxu0 0.0
  %809 = vmatpush1.msra.mxu0 0.0
  %810 = vmatprep.subr.mxu0 0.0
  %811 = vmatpush1.msra.mxu0 0.0
  %812 = vmatprep.subr.mxu0 0.0
  %813 = vmatpush1.msra.mxu0 0.0
  %814 = vmatprep.mubr.f32.mxu0 0.0
  %815 = vmatmul.mubr.f32.gmra.mrb[0].mxu0 %v173
  %v816 = vpop.f32.mrb[0].mxu0
  %v817 = vadd.f32 0.0, %v816
  %v818 = vpop.f32.mrb[0].mxu0
  %819 = vdwg.mxu0
  %s820 = scalar_lea.vmem %s3, 16
  %821 = vst [vmem:[%s820] sm:$0x3] %v817
  %822 = vmatprep.subr.mxu0 0.0
  %823 = vmatpush1.msra.mxu0 %v169
  %824 = vmatprep.subr.mxu0 0.0
  %825 = vmatpush1.msra.mxu0 0.0
  %826 = vmatprep.subr.mxu0 0.0
  %827 = vmatpush1.msra.mxu0 0.0
  %828 = vmatprep.subr.mxu0 0.0
  %829 = vmatpush1.msra.mxu0 0.0
  %830 = vmatprep.subr.mxu0 0.0
  %831 = vmatpush1.msra.mxu0 0.0
  %832 = vmatprep.subr.mxu0 0.0
  %833 = vmatpush1.msra.mxu0 0.0
  %834 = vmatprep.subr.mxu0 0.0
  %835 = vmatpush1.msra.mxu0 0.0
  %836 = vmatprep.subr.mxu0 0.0
  %837 = vmatpush1.msra.mxu0 0.0
  %838 = vmatprep.subr.mxu0 0.0
  %839 = vmatpush1.msra.mxu0 0.0
  %840 = vmatprep.subr.mxu0 0.0
  %841 = vmatpush1.msra.mxu0 0.0
  %842 = vmatprep.subr.mxu0 0.0
  %843 = vmatpush1.msra.mxu0 0.0
  %844 = vmatprep.subr.mxu0 0.0
  %845 = vmatpush1.msra.mxu0 0.0
  %846 = vmatprep.subr.mxu0 0.0
  %847 = vmatpush1.msra.mxu0 0.0
  %848 = vmatprep.subr.mxu0 0.0
  %849 = vmatpush1.msra.mxu0 0.0
  %850 = vmatprep.subr.mxu0 0.0
  %851 = vmatpush1.msra.mxu0 0.0
  %852 = vmatprep.subr.mxu0 0.0
  %853 = vmatpush1.msra.mxu0 0.0
  %854 = vmatprep.subr.mxu0 0.0
  %855 = vmatpush1.msra.mxu0 0.0
  %856 = vmatprep.subr.mxu0 0.0
  %857 = vmatpush1.msra.mxu0 0.0
  %858 = vmatprep.subr.mxu0 0.0
  %859 = vmatpush1.msra.mxu0 0.0
  %860 = vmatprep.subr.mxu0 0.0
  %861 = vmatpush1.msra.mxu0 0.0
  %862 = vmatprep.subr.mxu0 0.0
  %863 = vmatpush1.msra.mxu0 0.0
  %864 = vmatprep.subr.mxu0 0.0
  %865 = vmatpush1.msra.mxu0 0.0
  %866 = vmatprep.subr.mxu0 0.0
  %867 = vmatpush1.msra.mxu0 0.0
  %868 = vmatprep.subr.mxu0 0.0
  %869 = vmatpush1.msra.mxu0 0.0
  %870 = vmatprep.subr.mxu0 0.0
  %871 = vmatpush1.msra.mxu0 0.0
  %872 = vmatprep.subr.mxu0 0.0
  %873 = vmatpush1.msra.mxu0 0.0
  %874 = vmatprep.subr.mxu0 0.0
  %875 = vmatpush1.msra.mxu0 0.0
  %876 = vmatprep.subr.mxu0 0.0
  %877 = vmatpush1.msra.mxu0 0.0
  %878 = vmatprep.subr.mxu0 0.0
  %879 = vmatpush1.msra.mxu0 0.0
  %880 = vmatprep.subr.mxu0 0.0
  %881 = vmatpush1.msra.mxu0 0.0
  %882 = vmatprep.subr.mxu0 0.0
  %883 = vmatpush1.msra.mxu0 0.0
  %884 = vmatprep.subr.mxu0 0.0
  %885 = vmatpush1.msra.mxu0 0.0
  %886 = vmatprep.mubr.f32.mxu0 0.0
  %887 = vmatmul.mubr.f32.gmra.mrb[0].mxu0 %v173
  %v888 = vpop.f32.mrb[0].mxu0
  %v889 = vadd.f32 0.0, %v888
  %v890 = vpop.f32.mrb[0].mxu0
  %891 = vdwg.mxu0
  %s892 = scalar_lea.vmem %s3, 18
  %893 = vst [vmem:[%s892] sm:$0x3] %v889
  // Predicated region
  $region14: #{criterion_ohem_cross_entropy.2} parent=0 // pred_check
    _
  $region15: #{criterion_ohem_cross_entropy.2} parent=0 // pred_check_branch
    %895 = sbr.rel (0) target = $region17
  $region16: #{criterion_ohem_cross_entropy.2} parent=0 // pred_region
    _
  $region17: #{criterion_ohem_cross_entropy.2} parent=0 // pred_fallthru
    _
  // Predicated region
  $region18: #{criterion_ohem_cross_entropy.2} parent=0 // pred_check
    _
  $region19: #{criterion_ohem_cross_entropy.2} parent=0 // pred_check_branch
    %897 = sbr.rel (0) target = $region21
  $region20: #{criterion_ohem_cross_entropy.2} parent=0 // pred_region
    _
  $region21: #{criterion_ohem_cross_entropy.2} parent=0 // pred_fallthru
    _

// kernel: criterion_ohem_cross_entropy.3
$region0: #{criterion_ohem_cross_entropy.3}
  #allocation0 [shape = 'u32[]', space=smem, size = 0x4, offset = 0x4, fixed_abs, tag = 'smem constant byte address 0x4 - core index']
  #allocation1 [shape = 'u32[144,128]{1,0:T(1,128)}', space=vmem, size = 0x12000, scoped, tag = 'internal scratch']
  #allocation2 [shape = 'f32[40,128]{1,0:T(8,128)}', space=vmem, size = 0x5000, scoped, tag = 'scratch operand']
  #allocation3 [shape = 'f32[5,16,128]{2,1,0:T(8,128)}', space=vmem, size = 0xa000, scoped, tag = 'scratch operand']
  #allocation4 [shape = 'f32[16,128]{1,0:T(8,128)}', space=vmem, size = 0x2000, scoped, tag = 'scratch operand']
  #allocation5 [shape = 'f32[16,128]{1,0:T(8,128)}', space=vmem, size = 0x2000, scoped, tag = 'scratch operand']
  #allocation6 [shape = 'f32[1]{0:T(128)S(6)}', space=smem, size = 0x200, scoped, tag = 'scoped memory for criterion_ohem_cross_entropy.3']
  %s0 = inlined_call_operand.<no memory space> [shape: f32[1], index: 0, kind: input, shape index: {}]
  %s1 = inlined_call_operand.hbm [shape: f32[16,8], index: 1, kind: input, shape index: {}]
  %s2 = inlined_call_operand.hbm [shape: f32[2,40,8], index: 2, kind: input, shape index: {}]
  %s3 = inlined_call_operand.hbm [shape: f32[8,128], index: 3, kind: input, shape index: {}]
  %s4 = inlined_call_operand.hbm [shape: s32[2,16,128], index: 4, kind: input, shape index: {}]
  %s5 = inlined_call_operand.hbm [shape: f32[2,8,128], index: 5, kind: output, shape index: {}]
  %s6 = sld [smem:[#allocation0]]
  $region77: #{criterion_ohem_cross_entropy.3} parent=0
    _
  %s8 = ssub.s32 1, %s6
  %s9 = scalar_select 0, %s8, %s6
  %10 = sst [smem:[#allocation6]] %s0
  $region1: #{criterion_ohem_cross_entropy.3} parent=0
    #allocation7 [shape = 'u8[8192]{0}', space=vmem, size = 0x2000, scoped, tag = 'input window, operand 1, single buffered']
    #allocation8 [shape = 's32[2]{0}', space=sflag, size = 0x8, scoped, tag = 'scoped memory for criterion_ohem_cross_entropy.3']
    #allocation9 [shape = 's32[2]{0}', space=sflag, size = 0x8, scoped, tag = 'scoped memory for criterion_ohem_cross_entropy.3']
    #allocation10 [shape = 'u8[40960]{0}', space=vmem, size = 0xa000, scoped, tag = 'input window, operand 2']
    #allocation11 [shape = 's32[2]{0}', space=sflag, size = 0x8, scoped, tag = 'scoped memory for criterion_ohem_cross_entropy.3']
    #allocation12 [shape = 'u8[4096]{0}', space=vmem, size = 0x1000, scoped, tag = 'input window, operand 3, single buffered']
    #allocation13 [shape = 'u8[16384]{0}', space=vmem, size = 0x4000, scoped, tag = 'input window, operand 4']
    #allocation14 [shape = 's32[2]{0}', space=sflag, size = 0x8, scoped, tag = 'scoped memory for criterion_ohem_cross_entropy.3']
    #allocation15 [shape = 'u8[8192]{0}', space=vmem, size = 0x2000, scoped, tag = 'output window, operand 0']
    %11 = vsyncpa [#allocation8], 0
    %12 = vsyncpa [#allocation11], 0
    %s13 = scalar_lea.sflag [#allocation11], 1
    %14 = vsyncpa %s13, 0
    %15 = vsyncpa [#allocation14], 0
    %s16 = scalar_lea.sflag [#allocation14], 1
    %17 = vsyncpa %s16, 0
    %18 = vsyncpa [#allocation9], 0
    %s19 = scalar_lea.sflag [#allocation9], 1
    %20 = vsyncpa %s19, 0
    loop: start=0, step=1, limit=4
    $region2: #{criterion_ohem_cross_entropy.3} parent=1 // loop_pre_header
      _
    $region3: #{criterion_ohem_cross_entropy.3} parent=1 // loop_header
      %s22 = sphi 0, %s26
      %p23 = scmp.ge.s32.totalorder %s22, 4
      %s29 = sphi 0, %s41
      %s30 = sphi 0, %s37
      %s31 = sphi 0, %s29
      %s32 = sphi 0, %s30
      %s33 = sphi 0, %s31
      %s34 = sphi 0, %s32
      %s42 = sphi 0, %s42
      %s44 = sphi 0, %s42
      %s45 = sphi 0, %s44
      %s59 = sphi 0, %s45
      %s65 = sphi 0, %s67
      %s68 = sphi 0, %s65
      %s69 = sphi 0, %s68
      %s85 = sphi 0, %s69
      %s91 = sphi 0, %s93
      %s94 = sphi 0, %s91
      %s95 = sphi 0, %s94
      %s111 = sphi 0, %s95
      %s115 = sphi 0, %s115
      %s117 = sphi 0, %s115
      %s118 = sphi 0, %s117
      %s132 = sphi 0, %s118
      %s140 = sphi 0, %s142
      %s143 = sphi 0, %s140
      %s144 = sphi 0, %s143
      %s160 = sphi 0, %s144
      %s166 = sphi 0, %s168
      %s169 = sphi 0, %s166
      %s170 = sphi 0, %s169
      %s186 = sphi 0, %s170
    $region4: #{criterion_ohem_cross_entropy.3} parent=1 // loop_header_branch
      %25 = sbr.rel (%p23) target = $region8
    $region5: #{criterion_ohem_cross_entropy.3} parent=1 // loop_body
      %s27 = ssub.s32 %s22, 1
      %s28 = ssub.s32 %s22, 2
      %s35 = sadd.s32 1, %s30
      %p36 = scmp.ge.s32.totalorder %s35, 1
      %s37 = scalar_select %p36, 0, %s35
      %s38 = sadd.s32 1, %s29
      %s39 = scalar_select %p36, %s38, %s29
      %p40 = scmp.ge.s32.totalorder %s39, 2
      %s41 = scalar_select %p40, 0, %s39
      %s43 = sadd.s32 %s42, 1
      %p46 = scmp.eq.s32.totalorder %s22, 1
      %p47 = scmp.ne.s32.totalorder %s42, %s44
      %p48 = scmp.eq.s32.totalorder %s22, 0
      %p49 = por %p47, %p48
      %p50 = scmp.ne.s32.totalorder %s42, %s44
      %p51 = scmp.eq.s32.totalorder %s27, 1
      %p52 = por %p50, %p51
      %p53 = scmp.ne.s32.totalorder %s44, %s45
      %p54 = scmp.eq.s32.totalorder %s27, 0
      %p55 = por %p53, %p54
      %p56 = scmp.ne.s32.totalorder %s44, %s45
      %p57 = scmp.eq.s32.totalorder %s28, 1
      %p58 = por %p56, %p57
      %p60 = scmp.ne.s32.totalorder %s45, %s59
      %p61 = scmp.eq.s32.totalorder %s28, 0
      %p62 = por %p60, %p61
      %s63 = ssub.s32 %s30, %s37
      %p64 = scmp.eq.s32.totalorder %s63, 0
      %s66 = sadd.s32 %s65, 1
      %s67 = scalar_select %p64, %s65, %s66
      %p70 = pneg %p64
      %p71 = scmp.eq.s32.totalorder %s22, 1
      %p72 = por %p70, %p71
      %p73 = scmp.ne.s32.totalorder %s65, %s68
      %p74 = scmp.eq.s32.totalorder %s22, 0
      %p75 = por %p73, %p74
      %p76 = scmp.ne.s32.totalorder %s65, %s68
      %p77 = scmp.eq.s32.totalorder %s27, 1
      %p78 = por %p76, %p77
      %p79 = scmp.ne.s32.totalorder %s68, %s69
      %p80 = scmp.eq.s32.totalorder %s27, 0
      %p81 = por %p79, %p80
      %p82 = scmp.ne.s32.totalorder %s68, %s69
      %p83 = scmp.eq.s32.totalorder %s28, 1
      %p84 = por %p82, %p83
      %p86 = scmp.ne.s32.totalorder %s69, %s85
      %p87 = scmp.eq.s32.totalorder %s28, 0
      %p88 = por %p86, %p87
      %s89 = ssub.s32 %s29, %s41
      %p90 = scmp.eq.s32.totalorder %s89, 0
      %s92 = sadd.s32 %s91, 1
      %s93 = scalar_select %p90, %s91, %s92
      %p96 = pneg %p90
      %p97 = scmp.eq.s32.totalorder %s22, 1
      %p98 = por %p96, %p97
      %p99 = scmp.ne.s32.totalorder %s91, %s94
      %p100 = scmp.eq.s32.totalorder %s22, 0
      %p101 = por %p99, %p100
      %p102 = scmp.ne.s32.totalorder %s91, %s94
      %p103 = scmp.eq.s32.totalorder %s27, 1
      %p104 = por %p102, %p103
      %p105 = scmp.ne.s32.totalorder %s94, %s95
      %p106 = scmp.eq.s32.totalorder %s27, 0
      %p107 = por %p105, %p106
      %p108 = scmp.ne.s32.totalorder %s94, %s95
      %p109 = scmp.eq.s32.totalorder %s28, 1
      %p110 = por %p108, %p109
      %p112 = scmp.ne.s32.totalorder %s95, %s111
      %p113 = scmp.eq.s32.totalorder %s28, 0
      %p114 = por %p112, %p113
      %s116 = sadd.s32 %s115, 1
      %p119 = scmp.eq.s32.totalorder %s22, 1
      %p120 = scmp.ne.s32.totalorder %s115, %s117
      %p121 = scmp.eq.s32.totalorder %s22, 0
      %p122 = por %p120, %p121
      %p123 = scmp.ne.s32.totalorder %s115, %s117
      %p124 = scmp.eq.s32.totalorder %s27, 1
      %p125 = por %p123, %p124
      %p126 = scmp.ne.s32.totalorder %s117, %s118
      %p127 = scmp.eq.s32.totalorder %s27, 0
      %p128 = por %p126, %p127
      %p129 = scmp.ne.s32.totalorder %s117, %s118
      %p130 = scmp.eq.s32.totalorder %s28, 1
      %p131 = por %p129, %p130
      %p133 = scmp.ne.s32.totalorder %s118, %s132
      %p134 = scmp.eq.s32.totalorder %s28, 0
      %p135 = por %p133, %p134
      %s136 = ssub.s32 %s29, %s41
      %s137 = ssub.s32 %s30, %s37
      %s138 = sor.u32 %s136, %s137
      %p139 = scmp.eq.s32.totalorder %s138, 0
      %s141 = sadd.s32 %s140, 1
      %s142 = scalar_select %p139, %s140, %s141
      %p145 = pneg %p139
      %p146 = scmp.eq.s32.totalorder %s22, 1
      %p147 = por %p145, %p146
      %p148 = scmp.ne.s32.totalorder %s140, %s143
      %p149 = scmp.eq.s32.totalorder %s22, 0
      %p150 = por %p148, %p149
      %p151 = scmp.ne.s32.totalorder %s140, %s143
      %p152 = scmp.eq.s32.totalorder %s27, 1
      %p153 = por %p151, %p152
      %p154 = scmp.ne.s32.totalorder %s143, %s144
      %p155 = scmp.eq.s32.totalorder %s27, 0
      %p156 = por %p154, %p155
      %p157 = scmp.ne.s32.totalorder %s143, %s144
      %p158 = scmp.eq.s32.totalorder %s28, 1
      %p159 = por %p157, %p158
      %p161 = scmp.ne.s32.totalorder %s144, %s160
      %p162 = scmp.eq.s32.totalorder %s28, 0
      %p163 = por %p161, %p162
      %s164 = ssub.s32 %s29, %s41
      %p165 = scmp.eq.s32.totalorder %s164, 0
      %s167 = sadd.s32 %s166, 1
      %s168 = scalar_select %p165, %s166, %s167
      %p171 = pneg %p165
      %p172 = scmp.eq.s32.totalorder %s22, 1
      %p173 = por %p171, %p172
      %p174 = scmp.ne.s32.totalorder %s166, %s169
      %p175 = scmp.eq.s32.totalorder %s22, 0
      %p176 = por %p174, %p175
      %p177 = scmp.ne.s32.totalorder %s166, %s169
      %p178 = scmp.eq.s32.totalorder %s27, 1
      %p179 = por %p177, %p178
      %p180 = scmp.ne.s32.totalorder %s169, %s170
      %p181 = scmp.eq.s32.totalorder %s27, 0
      %p182 = por %p180, %p181
      %p183 = scmp.ne.s32.totalorder %s169, %s170
      %p184 = scmp.eq.s32.totalorder %s28, 1
      %p185 = por %p183, %p184
      %p187 = scmp.ne.s32.totalorder %s170, %s186
      %p188 = scmp.eq.s32.totalorder %s28, 0
      %p189 = por %p187, %p188
      %p190 = scmp.le.s32.totalorder 1, %s22
      %p191 = scmp.lt.s32.totalorder %s22, 3
      %p192 = pnand %p190, %p191
      %p193 = pneg %p192
      // Predicated region
      $region9: #{criterion_ohem_cross_entropy.3} parent=5 // pred_check
        _
      $region10: #{criterion_ohem_cross_entropy.3} parent=5 // pred_check_branch
        %195 = sbr.rel (%p192) target = $region12
      $region11: #{criterion_ohem_cross_entropy.3} parent=5 // pred_region
        %s196 = ssub.s32 %s22, 1
        // Predicated region
        $region13: #{criterion_ohem_cross_entropy.3} parent=11 // pred_check
          %p197 = pneg %p55
        $region14: #{criterion_ohem_cross_entropy.3} parent=11 // pred_check_branch
          %199 = sbr.rel (%p197) target = $region16
        $region15: #{criterion_ohem_cross_entropy.3} parent=11 // pred_region
          _
        $region16: #{criterion_ohem_cross_entropy.3} parent=11 // pred_fallthru
          _
        // Predicated region
        $region17: #{criterion_ohem_cross_entropy.3} parent=11 // pred_check
          %p200 = pneg %p81
        $region18: #{criterion_ohem_cross_entropy.3} parent=11 // pred_check_branch
          %202 = sbr.rel (%p200) target = $region20
        $region19: #{criterion_ohem_cross_entropy.3} parent=11 // pred_region
          %s203 = smul.u32 2, %s32
          %s205 = ssub.s32 256, 256
          %206 = vsyncadd [#allocation8], %s205
          %s207 = smul.addr %s203, 128
          %s208 = scalar_lea.hbm %s1, %s207
          %s209 = sshll.u32 [#allocation7], 4
          %s210 = int_to_ptr.vmem [resolvable:$true] %s209
          %215 = dma.hbm_to_vmem [thread:$0]  %s208, 256, %s210, [#allocation8], 128, 128, 8
        $region20: #{criterion_ohem_cross_entropy.3} parent=11 // pred_fallthru
          _
        // Predicated region
        $region21: #{criterion_ohem_cross_entropy.3} parent=11 // pred_check
          %p216 = pneg %p128
        $region22: #{criterion_ohem_cross_entropy.3} parent=11 // pred_check_branch
          %218 = sbr.rel (%p216) target = $region24
        $region23: #{criterion_ohem_cross_entropy.3} parent=11 // pred_region
          %s220 = ssub.s32 128, 128
          %221 = vsyncadd [#allocation11], %s220
          %s223 = sshll.u32 [#allocation12], 4
          %s224 = int_to_ptr.vmem [resolvable:$true] %s223
          %226 = dma.hbm_to_vmem [thread:$0]  %s3, 128, %s224, [#allocation11]
        $region24: #{criterion_ohem_cross_entropy.3} parent=11 // pred_fallthru
          _
      $region12: #{criterion_ohem_cross_entropy.3} parent=5 // pred_fallthru
        _
      %p227 = scmp.lt.s32.totalorder %s22, 2
      // Predicated region
      $region25: #{criterion_ohem_cross_entropy.3} parent=5 // pred_check
        %p228 = pneg %p227
      $region26: #{criterion_ohem_cross_entropy.3} parent=5 // pred_check_branch
        %230 = sbr.rel (%p228) target = $region28
      $region27: #{criterion_ohem_cross_entropy.3} parent=5 // pred_region
        // Predicated region
        $region29: #{criterion_ohem_cross_entropy.3} parent=27 // pred_check
          %p231 = pneg %p101
        $region30: #{criterion_ohem_cross_entropy.3} parent=27 // pred_check_branch
          %233 = sbr.rel (%p231) target = $region32
        $region31: #{criterion_ohem_cross_entropy.3} parent=27 // pred_region
          %s234 = sand.u32 %s22, 1
          %s235 = scalar_lea.sflag [#allocation11], %s234
          %s236 = sand.u32 %s91, 1
          %s237 = smul.addr %s236, 40
          %s238 = scalar_lea.vmem [#allocation10], %s237
          %s240 = ssub.s32 640, 640
          %241 = vsyncadd %s235, %s240
          %s242 = smul.addr %s29, 5
          %s243 = smul.addr %s242, 128
          %s244 = scalar_lea.hbm %s2, %s243
          %s245 = sshll.u32 %s238, 4
          %s246 = int_to_ptr.vmem [resolvable:$true] %s245
          %251 = dma.hbm_to_vmem [thread:$0]  %s244, 640, %s246, %s235, 128, 128, 8
        $region32: #{criterion_ohem_cross_entropy.3} parent=27 // pred_fallthru
          _
        // Predicated region
        $region33: #{criterion_ohem_cross_entropy.3} parent=27 // pred_check
          %p252 = pneg %p150
        $region34: #{criterion_ohem_cross_entropy.3} parent=27 // pred_check_branch
          %254 = sbr.rel (%p252) target = $region36
        $region35: #{criterion_ohem_cross_entropy.3} parent=27 // pred_region
          %s255 = sand.u32 %s140, 1
          %s256 = scalar_lea.sflag [#allocation14], %s255
          %s257 = sand.u32 %s140, 1
          %s258 = smul.addr %s257, 16
          %s259 = scalar_lea.vmem [#allocation13], %s258
          %s260 = smul.u32 2, %s30
          %s262 = ssub.s32 256, 256
          %263 = vsyncadd %s256, %s262
          %s264 = smul.addr %s29, 2
          %s265 = sadd.s32 %s260, %s264
          %s266 = smul.addr %s265, 128
          %s267 = scalar_lea.hbm %s4, %s266
          %s268 = sshll.u32 %s259, 4
          %s269 = int_to_ptr.vmem [resolvable:$true] %s268
          %274 = dma.hbm_to_vmem [thread:$0]  %s267, 256, %s269, %s256, 128, 128, 8
        $region36: #{criterion_ohem_cross_entropy.3} parent=27 // pred_fallthru
          _
      $region28: #{criterion_ohem_cross_entropy.3} parent=5 // pred_fallthru
        _
      %p275 = scmp.le.s32.totalorder 1, %s22
      %p276 = scmp.lt.s32.totalorder %s22, 3
      %p277 = pnand %p275, %p276
      %p278 = pneg %p277
      // Predicated region
      $region37: #{criterion_ohem_cross_entropy.3} parent=5 // pred_check
        _
      $region38: #{criterion_ohem_cross_entropy.3} parent=5 // pred_check_branch
        %280 = sbr.rel (%p277) target = $region40
      $region39: #{criterion_ohem_cross_entropy.3} parent=5 // pred_region
        %s281 = ssub.s32 %s22, 1
        // Predicated region
        $region41: #{criterion_ohem_cross_entropy.3} parent=39 // pred_check
          %p282 = pneg %p81
        $region42: #{criterion_ohem_cross_entropy.3} parent=39 // pred_check_branch
          %284 = sbr.rel (%p282) target = $region44
        $region43: #{criterion_ohem_cross_entropy.3} parent=39 // pred_region
          %285 = dma.done [#allocation8], 256
        $region44: #{criterion_ohem_cross_entropy.3} parent=39 // pred_fallthru
          _
        %s286 = sand.u32 %s27, 1
        %s287 = scalar_lea.sflag [#allocation11], %s286
        %s288 = sand.u32 %s94, 1
        %s289 = smul.addr %s288, 40
        %s290 = scalar_lea.vmem [#allocation10], %s289
        // Predicated region
        $region45: #{criterion_ohem_cross_entropy.3} parent=39 // pred_check
          %p291 = pneg %p107
        $region46: #{criterion_ohem_cross_entropy.3} parent=39 // pred_check_branch
          %293 = sbr.rel (%p291) target = $region48
        $region47: #{criterion_ohem_cross_entropy.3} parent=39 // pred_region
          %294 = dma.done %s287, 640
        $region48: #{criterion_ohem_cross_entropy.3} parent=39 // pred_fallthru
          _
        // Predicated region
        $region49: #{criterion_ohem_cross_entropy.3} parent=39 // pred_check
          %p295 = pneg %p128
        $region50: #{criterion_ohem_cross_entropy.3} parent=39 // pred_check_branch
          %297 = sbr.rel (%p295) target = $region52
        $region51: #{criterion_ohem_cross_entropy.3} parent=39 // pred_region
          %298 = dma.done [#allocation11], 128
        $region52: #{criterion_ohem_cross_entropy.3} parent=39 // pred_fallthru
          _
        %s299 = sand.u32 %s143, 1
        %s300 = scalar_lea.sflag [#allocation14], %s299
        %s301 = sand.u32 %s143, 1
        %s302 = smul.addr %s301, 16
        %s303 = scalar_lea.vmem [#allocation13], %s302
        // Predicated region
        $region53: #{criterion_ohem_cross_entropy.3} parent=39 // pred_check
          %p304 = pneg %p156
        $region54: #{criterion_ohem_cross_entropy.3} parent=39 // pred_check_branch
          %306 = sbr.rel (%p304) target = $region56
        $region55: #{criterion_ohem_cross_entropy.3} parent=39 // pred_region
          %307 = dma.done %s300, 256
        $region56: #{criterion_ohem_cross_entropy.3} parent=39 // pred_fallthru
          _
        %p308 = pneg %p55
        %p309 = pneg %p52
        %p310 = pneg %p81
        %p311 = pneg %p78
        %s312 = sand.u32 %s27, 1
        %s313 = scalar_lea.sflag [#allocation11], %s312
        %s314 = sand.u32 %s94, 1
        %s315 = smul.addr %s314, 40
        %s316 = scalar_lea.vmem [#allocation10], %s315
        %p317 = pneg %p107
        %p318 = pneg %p104
        %p319 = pneg %p128
        %p320 = pneg %p125
        %s321 = sand.u32 %s143, 1
        %s322 = scalar_lea.sflag [#allocation14], %s321
        %s323 = sand.u32 %s143, 1
        %s324 = smul.addr %s323, 16
        %s325 = scalar_lea.vmem [#allocation13], %s324
        %p326 = pneg %p156
        %p327 = pneg %p153
        %p328 = pneg %p182
        %p329 = pneg %p179
        %s330 = sand.u32 %s169, 1
        %s331 = scalar_lea.sflag [#allocation9], %s330
        %s332 = sand.u32 %s169, 1
        %s333 = smul.addr %s332, 8
        %s334 = scalar_lea.vmem [#allocation15], %s333
        %s335 = smul.u32 2, %s32
        %s336 = smul.u32 2, %s32
        %p337 = scmp.eq.s32.totalorder %s32, 0
        // Predicated region
        $region57: #{criterion_ohem_cross_entropy.3} parent=39 // pred_check
          %p338 = pneg %p337
        $region58: #{criterion_ohem_cross_entropy.3} parent=39 // pred_check_branch
          %340 = sbr.rel (%p338) target = $region60
        $region59: #{criterion_ohem_cross_entropy.3} parent=39 // pred_region
          %v341 = vld [vmem:[%s290] sm:$0xff]
          %v342 = vld [vmem:[%s290 + $0x8] sm:$0xff]
          %v343 = vld [vmem:[%s290 + $0x10] sm:$0xff]
          %v344 = vld [vmem:[%s290 + $0x18] sm:$0xff]
          %v345 = vld [vmem:[%s290 + $0x20] sm:$0xff]
          %v346 = vld [vmem:[#allocation12] sm:$0xff]
          %vm347 = vcmask 64512
          %v349 = vsel %vm347, %v341, 0
          %v352 = vsel %vm347, %v342, 0
          %v355 = vsel %vm347, %v343, 0
          %v358 = vsel %vm347, %v344, 0
          %v361 = vsel %vm347, %v345, 0
          %363 = vmatprep.subr.mxu0 0.0
          %364 = vmatpush1.msra.mxu0 %v346
          %365 = vmatprep.subr.mxu0 0.0
          %366 = vmatpush1.msra.mxu0 0.0
          %367 = vmatprep.subr.mxu0 0.0
          %368 = vmatpush1.msra.mxu0 0.0
          %369 = vmatprep.subr.mxu0 0.0
          %370 = vmatpush1.msra.mxu0 0.0
          %371 = vmatprep.subr.mxu0 0.0
          %372 = vmatpush1.msra.mxu0 0.0
          %373 = vmatprep.subr.mxu0 0.0
          %374 = vmatpush1.msra.mxu0 0.0
          %375 = vmatprep.subr.mxu0 0.0
          %376 = vmatpush1.msra.mxu0 0.0
          %377 = vmatprep.subr.mxu0 0.0
          %378 = vmatpush1.msra.mxu0 0.0
          %379 = vmatprep.subr.mxu0 0.0
          %380 = vmatpush1.msra.mxu0 0.0
          %381 = vmatprep.subr.mxu0 0.0
          %382 = vmatpush1.msra.mxu0 0.0
          %383 = vmatprep.subr.mxu0 0.0
          %384 = vmatpush1.msra.mxu0 0.0
          %385 = vmatprep.subr.mxu0 0.0
          %386 = vmatpush1.msra.mxu0 0.0
          %387 = vmatprep.subr.mxu0 0.0
          %388 = vmatpush1.msra.mxu0 0.0
          %389 = vmatprep.subr.mxu0 0.0
          %390 = vmatpush1.msra.mxu0 0.0
          %391 = vmatprep.subr.mxu0 0.0
          %392 = vmatpush1.msra.mxu0 0.0
          %393 = vmatprep.subr.mxu0 0.0
          %394 = vmatpush1.msra.mxu0 0.0
          %395 = vmatprep.subr.mxu0 0.0
          %396 = vmatpush1.msra.mxu0 0.0
          %397 = vmatprep.subr.mxu0 0.0
          %398 = vmatpush1.msra.mxu0 0.0
          %399 = vmatprep.subr.mxu0 0.0
          %400 = vmatpush1.msra.mxu0 0.0
          %401 = vmatprep.subr.mxu0 0.0
          %402 = vmatpush1.msra.mxu0 0.0
          %403 = vmatprep.subr.mxu0 0.0
          %404 = vmatpush1.msra.mxu0 0.0
          %405 = vmatprep.subr.mxu0 0.0
          %406 = vmatpush1.msra.mxu0 0.0
          %407 = vmatprep.subr.mxu0 0.0
          %408 = vmatpush1.msra.mxu0 0.0
          %409 = vmatprep.subr.mxu0 0.0
          %410 = vmatpush1.msra.mxu0 0.0
          %411 = vmatprep.subr.mxu0 0.0
          %412 = vmatpush1.msra.mxu0 0.0
          %413 = vmatprep.subr.mxu0 0.0
          %414 = vmatpush1.msra.mxu0 0.0
          %415 = vmatprep.subr.mxu0 0.0
          %416 = vmatpush1.msra.mxu0 0.0
          %417 = vmatprep.subr.mxu0 0.0
          %418 = vmatpush1.msra.mxu0 0.0
          %419 = vmatprep.subr.mxu0 0.0
          %420 = vmatpush1.msra.mxu0 0.0
          %421 = vmatprep.subr.mxu0 0.0
          %422 = vmatpush1.msra.mxu0 0.0
          %423 = vmatprep.subr.mxu0 0.0
          %424 = vmatpush1.msra.mxu0 0.0
          %425 = vmatprep.subr.mxu0 0.0
          %426 = vmatpush1.msra.mxu0 0.0
          %427 = vmatprep.mubr.f32.mxu0 0.0
          %428 = vmatmul.mubr.f32.gmra.mrb[0].mxu0 %v349
          %v429 = vpop.f32.mrb[0].mxu0
          %v430 = vadd.f32 0.0, %v429
          %v431 = vpop.f32.mrb[0].mxu0
          %432 = vmatprep.mubr.f32.mxu0 0.0
          %433 = vmatmul.mubr.f32.gmra.mrb[0].mxu0 %v352
          %v434 = vpop.f32.mrb[0].mxu0
          %v435 = vadd.f32 0.0, %v434
          %v436 = vpop.f32.mrb[0].mxu0
          %437 = vmatprep.mubr.f32.mxu0 0.0
          %438 = vmatmul.mubr.f32.gmra.mrb[0].mxu0 %v355
          %v439 = vpop.f32.mrb[0].mxu0
          %v440 = vadd.f32 0.0, %v439
          %v441 = vpop.f32.mrb[0].mxu0
          %442 = vmatprep.mubr.f32.mxu0 0.0
          %443 = vmatmul.mubr.f32.gmra.mrb[0].mxu0 %v358
          %v444 = vpop.f32.mrb[0].mxu0
          %v445 = vadd.f32 0.0, %v444
          %v446 = vpop.f32.mrb[0].mxu0
          %447 = vmatprep.mubr.f32.mxu0 0.0
          %448 = vmatmul.mubr.f32.gmra.mrb[0].mxu0 %v361
          %v449 = vpop.f32.mrb[0].mxu0
          %v450 = vadd.f32 0.0, %v449
          %v451 = vpop.f32.mrb[0].mxu0
          %452 = vdwg.mxu0
          %453 = vst [vmem:[#allocation2] sm:$0xff] %v430
          %454 = vst [vmem:[#allocation2 + $0x8] sm:$0xff] %v435
          %455 = vst [vmem:[#allocation2 + $0x10] sm:$0xff] %v440
          %456 = vst [vmem:[#allocation2 + $0x18] sm:$0xff] %v445
          %457 = vst [vmem:[#allocation2 + $0x20] sm:$0xff] %v450
          %458 = vst [vmem:[#allocation4] sm:$0xff] 0.0
          %459 = vst [vmem:[#allocation4 + $0x8] sm:$0xff] 0.0
          %460 = vst [vmem:[#allocation5] sm:$0xff] 0.0
          %461 = vst [vmem:[#allocation5 + $0x8] sm:$0xff] 0.0
        $region60: #{criterion_ohem_cross_entropy.3} parent=39 // pred_fallthru
          _
        %v462 = vld [vmem:[#allocation7] sm:$0xff]
        %v463 = vld [vmem:[#allocation7 + $0x8] sm:$0xff]
        %v464 = vld [vmem:[%s303] sm:$0xff]
        %v465 = vld [vmem:[%s303 + $0x8] sm:$0xff]
        %s466 = sld [smem:[#allocation6]]
        %v467 = vld [vmem:[#allocation2] sm:$0xff]
        %vm468 = vcmask 64512
        %v470 = vsel %vm468, %v462, 0
        %v473 = vsel %vm468, %v463, 0
        %475 = vmatprep.subr.mxu0 0.0
        %476 = vmatpush1.msra.mxu0 %v467
        %477 = vmatprep.subr.mxu0 0.0
        %478 = vmatpush1.msra.mxu0 0.0
        %479 = vmatprep.subr.mxu0 0.0
        %480 = vmatpush1.msra.mxu0 0.0
        %481 = vmatprep.subr.mxu0 0.0
        %482 = vmatpush1.msra.mxu0 0.0
        %483 = vmatprep.subr.mxu0 0.0
        %484 = vmatpush1.msra.mxu0 0.0
        %485 = vmatprep.subr.mxu0 0.0
        %486 = vmatpush1.msra.mxu0 0.0
        %487 = vmatprep.subr.mxu0 0.0
        %488 = vmatpush1.msra.mxu0 0.0
        %489 = vmatprep.subr.mxu0 0.0
        %490 = vmatpush1.msra.mxu0 0.0
        %491 = vmatprep.subr.mxu0 0.0
        %492 = vmatpush1.msra.mxu0 0.0
        %493 = vmatprep.subr.mxu0 0.0
        %494 = vmatpush1.msra.mxu0 0.0
        %495 = vmatprep.subr.mxu0 0.0
        %496 = vmatpush1.msra.mxu0 0.0
        %497 = vmatprep.subr.mxu0 0.0
        %498 = vmatpush1.msra.mxu0 0.0
        %499 = vmatprep.subr.mxu0 0.0
        %500 = vmatpush1.msra.mxu0 0.0
        %501 = vmatprep.subr.mxu0 0.0
        %502 = vmatpush1.msra.mxu0 0.0
        %503 = vmatprep.subr.mxu0 0.0
        %504 = vmatpush1.msra.mxu0 0.0
        %505 = vmatprep.subr.mxu0 0.0
        %506 = vmatpush1.msra.mxu0 0.0
        %507 = vmatprep.subr.mxu0 0.0
        %508 = vmatpush1.msra.mxu0 0.0
        %509 = vmatprep.subr.mxu0 0.0
        %510 = vmatpush1.msra.mxu0 0.0
        %511 = vmatprep.subr.mxu0 0.0
        %512 = vmatpush1.msra.mxu0 0.0
        %513 = vmatprep.subr.mxu0 0.0
        %514 = vmatpush1.msra.mxu0 0.0
        %515 = vmatprep.subr.mxu0 0.0
        %516 = vmatpush1.msra.mxu0 0.0
        %517 = vmatprep.subr.mxu0 0.0
        %518 = vmatpush1.msra.mxu0 0.0
        %519 = vmatprep.subr.mxu0 0.0
        %520 = vmatpush1.msra.mxu0 0.0
        %521 = vmatprep.subr.mxu0 0.0
        %522 = vmatpush1.msra.mxu0 0.0
        %523 = vmatprep.subr.mxu0 0.0
        %524 = vmatpush1.msra.mxu0 0.0
        %525 = vmatprep.subr.mxu0 0.0
        %526 = vmatpush1.msra.mxu0 0.0
        %527 = vmatprep.subr.mxu0 0.0
        %528 = vmatpush1.msra.mxu0 0.0
        %529 = vmatprep.subr.mxu0 0.0
        %530 = vmatpush1.msra.mxu0 0.0
        %531 = vmatprep.subr.mxu0 0.0
        %532 = vmatpush1.msra.mxu0 0.0
        %533 = vmatprep.subr.mxu0 0.0
        %534 = vmatpush1.msra.mxu0 0.0
        %535 = vmatprep.subr.mxu0 0.0
        %536 = vmatpush1.msra.mxu0 0.0
        %537 = vmatprep.subr.mxu0 0.0
        %538 = vmatpush1.msra.mxu0 0.0
        %539 = vmatprep.mubr.f32.mxu0 0.0
        %540 = vmatmul.mubr.f32.gmra.mrb[0].mxu0 %v470
        %v541 = vpop.f32.mrb[0].mxu0
        %v542 = vadd.f32 0.0, %v541
        %v543 = vpop.f32.mrb[0].mxu0
        %544 = vmatprep.mubr.f32.mxu0 0.0
        %545 = vmatmul.mubr.f32.gmra.mrb[0].mxu0 %v473
        %v546 = vpop.f32.mrb[0].mxu0
        %v547 = vadd.f32 0.0, %v546
        %v548 = vpop.f32.mrb[0].mxu0
        %549 = vdwg.mxu0
        %550 = vst [vmem:[#allocation3] sm:$0xff] %v542
        %551 = vst [vmem:[#allocation3 + $0x8] sm:$0xff] %v547
        %vm552 = vcmp.eq.s32.totalorder %v464, 0
        %vm553 = vcmp.eq.s32.totalorder %v465, 0
        %v554 = vsel %vm552, %v542, 0.0
        %v555 = vsel %vm553, %v547, 0.0
        %v556 = vld [vmem:[#allocation2 + $0x8] sm:$0xff]
        %557 = vmatprep.subr.mxu0 0.0
        %558 = vmatpush1.msra.mxu0 %v556
        %559 = vmatprep.subr.mxu0 0.0
        %560 = vmatpush1.msra.mxu0 0.0
        %561 = vmatprep.subr.mxu0 0.0
        %562 = vmatpush1.msra.mxu0 0.0
        %563 = vmatprep.subr.mxu0 0.0
        %564 = vmatpush1.msra.mxu0 0.0
        %565 = vmatprep.subr.mxu0 0.0
        %566 = vmatpush1.msra.mxu0 0.0
        %567 = vmatprep.subr.mxu0 0.0
        %568 = vmatpush1.msra.mxu0 0.0
        %569 = vmatprep.subr.mxu0 0.0
        %570 = vmatpush1.msra.mxu0 0.0
        %571 = vmatprep.subr.mxu0 0.0
        %572 = vmatpush1.msra.mxu0 0.0
        %573 = vmatprep.subr.mxu0 0.0
        %574 = vmatpush1.msra.mxu0 0.0
        %575 = vmatprep.subr.mxu0 0.0
        %576 = vmatpush1.msra.mxu0 0.0
        %577 = vmatprep.subr.mxu0 0.0
        %578 = vmatpush1.msra.mxu0 0.0
        %579 = vmatprep.subr.mxu0 0.0
        %580 = vmatpush1.msra.mxu0 0.0
        %581 = vmatprep.subr.mxu0 0.0
        %582 = vmatpush1.msra.mxu0 0.0
        %583 = vmatprep.subr.mxu0 0.0
        %584 = vmatpush1.msra.mxu0 0.0
        %585 = vmatprep.subr.mxu0 0.0
        %586 = vmatpush1.msra.mxu0 0.0
        %587 = vmatprep.subr.mxu0 0.0
        %588 = vmatpush1.msra.mxu0 0.0
        %589 = vmatprep.subr.mxu0 0.0
        %590 = vmatpush1.msra.mxu0 0.0
        %591 = vmatprep.subr.mxu0 0.0
        %592 = vmatpush1.msra.mxu0 0.0
        %593 = vmatprep.subr.mxu0 0.0
        %594 = vmatpush1.msra.mxu0 0.0
        %595 = vmatprep.subr.mxu0 0.0
        %596 = vmatpush1.msra.mxu0 0.0
        %597 = vmatprep.subr.mxu0 0.0
        %598 = vmatpush1.msra.mxu0 0.0
        %599 = vmatprep.subr.mxu0 0.0
        %600 = vmatpush1.msra.mxu0 0.0
        %601 = vmatprep.subr.mxu0 0.0
        %602 = vmatpush1.msra.mxu0 0.0
        %603 = vmatprep.subr.mxu0 0.0
        %604 = vmatpush1.msra.mxu0 0.0
        %605 = vmatprep.subr.mxu0 0.0
        %606 = vmatpush1.msra.mxu0 0.0
        %607 = vmatprep.subr.mxu0 0.0
        %608 = vmatpush1.msra.mxu0 0.0
        %609 = vmatprep.subr.mxu0 0.0
        %610 = vmatpush1.msra.mxu0 0.0
        %611 = vmatprep.subr.mxu0 0.0
        %612 = vmatpush1.msra.mxu0 0.0
        %613 = vmatprep.subr.mxu0 0.0
        %614 = vmatpush1.msra.mxu0 0.0
        %615 = vmatprep.subr.mxu0 0.0
        %616 = vmatpush1.msra.mxu0 0.0
        %617 = vmatprep.subr.mxu0 0.0
        %618 = vmatpush1.msra.mxu0 0.0
        %619 = vmatprep.subr.mxu0 0.0
        %620 = vmatpush1.msra.mxu0 0.0
        %621 = vmatprep.mubr.f32.mxu0 0.0
        %622 = vmatmul.mubr.f32.gmra.mrb[0].mxu0 %v470
        %v623 = vpop.f32.mrb[0].mxu0
        %v624 = vadd.f32 0.0, %v623
        %v625 = vpop.f32.mrb[0].mxu0
        %626 = vmatprep.mubr.f32.mxu0 0.0
        %627 = vmatmul.mubr.f32.gmra.mrb[0].mxu0 %v473
        %v628 = vpop.f32.mrb[0].mxu0
        %v629 = vadd.f32 0.0, %v628
        %v630 = vpop.f32.mrb[0].mxu0
        %631 = vdwg.mxu0
        %s632 = scalar_lea.vmem [#allocation3], 16
        %633 = vst [vmem:[%s632] sm:$0xff] %v624
        %634 = vst [vmem:[%s632 + $0x8] sm:$0xff] %v629
        %vm635 = vcmp.eq.s32.totalorder %v464, 1
        %vm636 = vcmp.eq.s32.totalorder %v465, 1
        %v637 = vsel %vm635, %v624, 0.0
        %v638 = vsel %vm636, %v629, 0.0
        %v639 = vmax.f32 %v542, %v624
        %v640 = vmax.f32 %v547, %v629
        %v641 = vadd.f32 %v554, %v637
        %v642 = vadd.f32 %v555, %v638
        %v643 = vld [vmem:[#allocation2 + $0x10] sm:$0xff]
        %644 = vmatprep.subr.mxu0 0.0
        %645 = vmatpush1.msra.mxu0 %v643
        %646 = vmatprep.subr.mxu0 0.0
        %647 = vmatpush1.msra.mxu0 0.0
        %648 = vmatprep.subr.mxu0 0.0
        %649 = vmatpush1.msra.mxu0 0.0
        %650 = vmatprep.subr.mxu0 0.0
        %651 = vmatpush1.msra.mxu0 0.0
        %652 = vmatprep.subr.mxu0 0.0
        %653 = vmatpush1.msra.mxu0 0.0
        %654 = vmatprep.subr.mxu0 0.0
        %655 = vmatpush1.msra.mxu0 0.0
        %656 = vmatprep.subr.mxu0 0.0
        %657 = vmatpush1.msra.mxu0 0.0
        %658 = vmatprep.subr.mxu0 0.0
        %659 = vmatpush1.msra.mxu0 0.0
        %660 = vmatprep.subr.mxu0 0.0
        %661 = vmatpush1.msra.mxu0 0.0
        %662 = vmatprep.subr.mxu0 0.0
        %663 = vmatpush1.msra.mxu0 0.0
        %664 = vmatprep.subr.mxu0 0.0
        %665 = vmatpush1.msra.mxu0 0.0
        %666 = vmatprep.subr.mxu0 0.0
        %667 = vmatpush1.msra.mxu0 0.0
        %668 = vmatprep.subr.mxu0 0.0
        %669 = vmatpush1.msra.mxu0 0.0
        %670 = vmatprep.subr.mxu0 0.0
        %671 = vmatpush1.msra.mxu0 0.0
        %672 = vmatprep.subr.mxu0 0.0
        %673 = vmatpush1.msra.mxu0 0.0
        %674 = vmatprep.subr.mxu0 0.0
        %675 = vmatpush1.msra.mxu0 0.0
        %676 = vmatprep.subr.mxu0 0.0
        %677 = vmatpush1.msra.mxu0 0.0
        %678 = vmatprep.subr.mxu0 0.0
        %679 = vmatpush1.msra.mxu0 0.0
        %680 = vmatprep.subr.mxu0 0.0
        %681 = vmatpush1.msra.mxu0 0.0
        %682 = vmatprep.subr.mxu0 0.0
        %683 = vmatpush1.msra.mxu0 0.0
        %684 = vmatprep.subr.mxu0 0.0
        %685 = vmatpush1.msra.mxu0 0.0
        %686 = vmatprep.subr.mxu0 0.0
        %687 = vmatpush1.msra.mxu0 0.0
        %688 = vmatprep.subr.mxu0 0.0
        %689 = vmatpush1.msra.mxu0 0.0
        %690 = vmatprep.subr.mxu0 0.0
        %691 = vmatpush1.msra.mxu0 0.0
        %692 = vmatprep.subr.mxu0 0.0
        %693 = vmatpush1.msra.mxu0 0.0
        %694 = vmatprep.subr.mxu0 0.0
        %695 = vmatpush1.msra.mxu0 0.0
        %696 = vmatprep.subr.mxu0 0.0
        %697 = vmatpush1.msra.mxu0 0.0
        %698 = vmatprep.subr.mxu0 0.0
        %699 = vmatpush1.msra.mxu0 0.0
        %700 = vmatprep.subr.mxu0 0.0
        %701 = vmatpush1.msra.mxu0 0.0
        %702 = vmatprep.subr.mxu0 0.0
        %703 = vmatpush1.msra.mxu0 0.0
        %704 = vmatprep.subr.mxu0 0.0
        %705 = vmatpush1.msra.mxu0 0.0
        %706 = vmatprep.subr.mxu0 0.0
        %707 = vmatpush1.msra.mxu0 0.0
        %708 = vmatprep.mubr.f32.mxu0 0.0
        %709 = vmatmul.mubr.f32.gmra.mrb[0].mxu0 %v470
        %v710 = vpop.f32.mrb[0].mxu0
        %v711 = vadd.f32 0.0, %v710
        %v712 = vpop.f32.mrb[0].mxu0
        %713 = vmatprep.mubr.f32.mxu0 0.0
        %714 = vmatmul.mubr.f32.gmra.mrb[0].mxu0 %v473
        %v715 = vpop.f32.mrb[0].mxu0
        %v716 = vadd.f32 0.0, %v715
        %v717 = vpop.f32.mrb[0].mxu0
        %718 = vdwg.mxu0
        %s719 = scalar_lea.vmem [#allocation3], 32
        %720 = vst [vmem:[%s719] sm:$0xff] %v711
        %721 = vst [vmem:[%s719 + $0x8] sm:$0xff] %v716
        %vm722 = vcmp.eq.s32.totalorder %v464, 2
        %vm723 = vcmp.eq.s32.totalorder %v465, 2
        %v724 = vsel %vm722, %v711, 0.0
        %v725 = vsel %vm723, %v716, 0.0
        %v726 = vmax.f32 %v639, %v711
        %v727 = vmax.f32 %v640, %v716
        %v728 = vadd.f32 %v641, %v724
        %v729 = vadd.f32 %v642, %v725
        %v730 = vld [vmem:[#allocation2 + $0x18] sm:$0xff]
        %731 = vmatprep.subr.mxu0 0.0
        %732 = vmatpush1.msra.mxu0 %v730
        %733 = vmatprep.subr.mxu0 0.0
        %734 = vmatpush1.msra.mxu0 0.0
        %735 = vmatprep.subr.mxu0 0.0
        %736 = vmatpush1.msra.mxu0 0.0
        %737 = vmatprep.subr.mxu0 0.0
        %738 = vmatpush1.msra.mxu0 0.0
        %739 = vmatprep.subr.mxu0 0.0
        %740 = vmatpush1.msra.mxu0 0.0
        %741 = vmatprep.subr.mxu0 0.0
        %742 = vmatpush1.msra.mxu0 0.0
        %743 = vmatprep.subr.mxu0 0.0
        %744 = vmatpush1.msra.mxu0 0.0
        %745 = vmatprep.subr.mxu0 0.0
        %746 = vmatpush1.msra.mxu0 0.0
        %747 = vmatprep.subr.mxu0 0.0
        %748 = vmatpush1.msra.mxu0 0.0
        %749 = vmatprep.subr.mxu0 0.0
        %750 = vmatpush1.msra.mxu0 0.0
        %751 = vmatprep.subr.mxu0 0.0
        %752 = vmatpush1.msra.mxu0 0.0
        %753 = vmatprep.subr.mxu0 0.0
        %754 = vmatpush1.msra.mxu0 0.0
        %755 = vmatprep.subr.mxu0 0.0
        %756 = vmatpush1.msra.mxu0 0.0
        %757 = vmatprep.subr.mxu0 0.0
        %758 = vmatpush1.msra.mxu0 0.0
        %759 = vmatprep.subr.mxu0 0.0
        %760 = vmatpush1.msra.mxu0 0.0
        %761 = vmatprep.subr.mxu0 0.0
        %762 = vmatpush1.msra.mxu0 0.0
        %763 = vmatprep.subr.mxu0 0.0
        %764 = vmatpush1.msra.mxu0 0.0
        %765 = vmatprep.subr.mxu0 0.0
        %766 = vmatpush1.msra.mxu0 0.0
        %767 = vmatprep.subr.mxu0 0.0
        %768 = vmatpush1.msra.mxu0 0.0
        %769 = vmatprep.subr.mxu0 0.0
        %770 = vmatpush1.msra.mxu0 0.0
        %771 = vmatprep.subr.mxu0 0.0
        %772 = vmatpush1.msra.mxu0 0.0
        %773 = vmatprep.subr.mxu0 0.0
        %774 = vmatpush1.msra.mxu0 0.0
        %775 = vmatprep.subr.mxu0 0.0
        %776 = vmatpush1.msra.mxu0 0.0
        %777 = vmatprep.subr.mxu0 0.0
        %778 = vmatpush1.msra.mxu0 0.0
        %779 = vmatprep.subr.mxu0 0.0
        %780 = vmatpush1.msra.mxu0 0.0
        %781 = vmatprep.subr.mxu0 0.0
        %782 = vmatpush1.msra.mxu0 0.0
        %783 = vmatprep.subr.mxu0 0.0
        %784 = vmatpush1.msra.mxu0 0.0
        %785 = vmatprep.subr.mxu0 0.0
        %786 = vmatpush1.msra.mxu0 0.0
        %787 = vmatprep.subr.mxu0 0.0
        %788 = vmatpush1.msra.mxu0 0.0
        %789 = vmatprep.subr.mxu0 0.0
        %790 = vmatpush1.msra.mxu0 0.0
        %791 = vmatprep.subr.mxu0 0.0
        %792 = vmatpush1.msra.mxu0 0.0
        %793 = vmatprep.subr.mxu0 0.0
        %794 = vmatpush1.msra.mxu0 0.0
        %795 = vmatprep.mubr.f32.mxu0 0.0
        %796 = vmatmul.mubr.f32.gmra.mrb[0].mxu0 %v470
        %v797 = vpop.f32.mrb[0].mxu0
        %v798 = vadd.f32 0.0, %v797
        %v799 = vpop.f32.mrb[0].mxu0
        %800 = vmatprep.mubr.f32.mxu0 0.0
        %801 = vmatmul.mubr.f32.gmra.mrb[0].mxu0 %v473
        %v802 = vpop.f32.mrb[0].mxu0
        %v803 = vadd.f32 0.0, %v802
        %v804 = vpop.f32.mrb[0].mxu0
        %805 = vdwg.mxu0
        %s806 = scalar_lea.vmem [#allocation3], 48
        %807 = vst [vmem:[%s806] sm:$0xff] %v798
        %808 = vst [vmem:[%s806 + $0x8] sm:$0xff] %v803
        %vm809 = vcmp.eq.s32.totalorder %v464, 3
        %vm810 = vcmp.eq.s32.totalorder %v465, 3
        %v811 = vsel %vm809, %v798, 0.0
        %v812 = vsel %vm810, %v803, 0.0
        %v813 = vmax.f32 %v726, %v798
        %v814 = vmax.f32 %v727, %v803
        %v815 = vadd.f32 %v728, %v811
        %v816 = vadd.f32 %v729, %v812
        %v817 = vld [vmem:[#allocation2 + $0x20] sm:$0xff]
        %818 = vmatprep.subr.mxu0 0.0
        %819 = vmatpush1.msra.mxu0 %v817
        %820 = vmatprep.subr.mxu0 0.0
        %821 = vmatpush1.msra.mxu0 0.0
        %822 = vmatprep.subr.mxu0 0.0
        %823 = vmatpush1.msra.mxu0 0.0
        %824 = vmatprep.subr.mxu0 0.0
        %825 = vmatpush1.msra.mxu0 0.0
        %826 = vmatprep.subr.mxu0 0.0
        %827 = vmatpush1.msra.mxu0 0.0
        %828 = vmatprep.subr.mxu0 0.0
        %829 = vmatpush1.msra.mxu0 0.0
        %830 = vmatprep.subr.mxu0 0.0
        %831 = vmatpush1.msra.mxu0 0.0
        %832 = vmatprep.subr.mxu0 0.0
        %833 = vmatpush1.msra.mxu0 0.0
        %834 = vmatprep.subr.mxu0 0.0
        %835 = vmatpush1.msra.mxu0 0.0
        %836 = vmatprep.subr.mxu0 0.0
        %837 = vmatpush1.msra.mxu0 0.0
        %838 = vmatprep.subr.mxu0 0.0
        %839 = vmatpush1.msra.mxu0 0.0
        %840 = vmatprep.subr.mxu0 0.0
        %841 = vmatpush1.msra.mxu0 0.0
        %842 = vmatprep.subr.mxu0 0.0
        %843 = vmatpush1.msra.mxu0 0.0
        %844 = vmatprep.subr.mxu0 0.0
        %845 = vmatpush1.msra.mxu0 0.0
        %846 = vmatprep.subr.mxu0 0.0
        %847 = vmatpush1.msra.mxu0 0.0
        %848 = vmatprep.subr.mxu0 0.0
        %849 = vmatpush1.msra.mxu0 0.0
        %850 = vmatprep.subr.mxu0 0.0
        %851 = vmatpush1.msra.mxu0 0.0
        %852 = vmatprep.subr.mxu0 0.0
        %853 = vmatpush1.msra.mxu0 0.0
        %854 = vmatprep.subr.mxu0 0.0
        %855 = vmatpush1.msra.mxu0 0.0
        %856 = vmatprep.subr.mxu0 0.0
        %857 = vmatpush1.msra.mxu0 0.0
        %858 = vmatprep.subr.mxu0 0.0
        %859 = vmatpush1.msra.mxu0 0.0
        %860 = vmatprep.subr.mxu0 0.0
        %861 = vmatpush1.msra.mxu0 0.0
        %862 = vmatprep.subr.mxu0 0.0
        %863 = vmatpush1.msra.mxu0 0.0
        %864 = vmatprep.subr.mxu0 0.0
        %865 = vmatpush1.msra.mxu0 0.0
        %866 = vmatprep.subr.mxu0 0.0
        %867 = vmatpush1.msra.mxu0 0.0
        %868 = vmatprep.subr.mxu0 0.0
        %869 = vmatpush1.msra.mxu0 0.0
        %870 = vmatprep.subr.mxu0 0.0
        %871 = vmatpush1.msra.mxu0 0.0
        %872 = vmatprep.subr.mxu0 0.0
        %873 = vmatpush1.msra.mxu0 0.0
        %874 = vmatprep.subr.mxu0 0.0
        %875 = vmatpush1.msra.mxu0 0.0
        %876 = vmatprep.subr.mxu0 0.0
        %877 = vmatpush1.msra.mxu0 0.0
        %878 = vmatprep.subr.mxu0 0.0
        %879 = vmatpush1.msra.mxu0 0.0
        %880 = vmatprep.subr.mxu0 0.0
        %881 = vmatpush1.msra.mxu0 0.0
        %882 = vmatprep.mubr.f32.mxu0 0.0
        %883 = vmatmul.mubr.f32.gmra.mrb[0].mxu0 %v470
        %v884 = vpop.f32.mrb[0].mxu0
        %v885 = vadd.f32 0.0, %v884
        %v886 = vpop.f32.mrb[0].mxu0
        %887 = vmatprep.mubr.f32.mxu0 0.0
        %888 = vmatmul.mubr.f32.gmra.mrb[0].mxu0 %v473
        %v889 = vpop.f32.mrb[0].mxu0
        %v890 = vadd.f32 0.0, %v889
        %v891 = vpop.f32.mrb[0].mxu0
        %892 = vdwg.mxu0
        %s893 = scalar_lea.vmem [#allocation3], 64
        %894 = vst [vmem:[%s893] sm:$0xff] %v885
        %895 = vst [vmem:[%s893 + $0x8] sm:$0xff] %v890
        %vm896 = vcmp.eq.s32.totalorder %v464, 4
        %vm897 = vcmp.eq.s32.totalorder %v465, 4
        %v898 = vsel %vm896, %v885, 0.0
        %v899 = vsel %vm897, %v890, 0.0
        %v900 = vmax.f32 %v813, %v885
        %v901 = vmax.f32 %v814, %v890
        %v902 = vadd.f32 %v815, %v898
        %v903 = vadd.f32 %v816, %v899
        %v904 = vld [vmem:[#allocation3] sm:$0xff]
        %v905 = vld [vmem:[#allocation3 + $0x8] sm:$0xff]
        %v906 = vsub.f32 %v904, %v900
        %v907 = vsub.f32 %v905, %v901
        %v908 = vmul.f32 %v906, 1.442695
        %v909 = vpow.pop %v908
        %v910 = vmul.f32 %v907, 1.442695
        %v911 = vpow.pop %v910
        %v912 = vld [vmem:[%s632] sm:$0xff]
        %v913 = vld [vmem:[%s632 + $0x8] sm:$0xff]
        %v914 = vsub.f32 %v912, %v900
        %v915 = vsub.f32 %v913, %v901
        %v916 = vmul.f32 %v914, 1.442695
        %v917 = vpow.pop %v916
        %v918 = vmul.f32 %v915, 1.442695
        %v919 = vpow.pop %v918
        %v920 = vadd.f32 %v909, %v917
        %v921 = vadd.f32 %v911, %v919
        %v922 = vld [vmem:[%s719] sm:$0xff]
        %v923 = vld [vmem:[%s719 + $0x8] sm:$0xff]
        %v924 = vsub.f32 %v922, %v900
        %v925 = vsub.f32 %v923, %v901
        %v926 = vmul.f32 %v924, 1.442695
        %v927 = vpow.pop %v926
        %v928 = vmul.f32 %v925, 1.442695
        %v929 = vpow.pop %v928
        %v930 = vadd.f32 %v920, %v927
        %v931 = vadd.f32 %v921, %v929
        %v932 = vld [vmem:[%s806] sm:$0xff]
        %v933 = vld [vmem:[%s806 + $0x8] sm:$0xff]
        %v934 = vsub.f32 %v932, %v900
        %v935 = vsub.f32 %v933, %v901
        %v936 = vmul.f32 %v934, 1.442695
        %v937 = vpow.pop %v936
        %v938 = vmul.f32 %v935, 1.442695
        %v939 = vpow.pop %v938
        %v940 = vadd.f32 %v930, %v937
        %v941 = vadd.f32 %v931, %v939
        %v942 = vld [vmem:[%s893] sm:$0xff]
        %v943 = vld [vmem:[%s893 + $0x8] sm:$0xff]
        %v944 = vsub.f32 %v942, %v900
        %v945 = vsub.f32 %v943, %v901
        %v946 = vmul.f32 %v944, 1.442695
        %v947 = vpow.pop %v946
        %v948 = vmul.f32 %v945, 1.442695
        %v949 = vpow.pop %v948
        %v950 = vadd.f32 %v940, %v947
        %v951 = vadd.f32 %v941, %v949
        %v952 = vlog2.pop %v950
        %v953 = vmul.f32 %v952, 0.6931472
        %v954 = vlog2.pop %v951
        %v955 = vmul.f32 %v954, 0.6931472
        %v956 = vadd.f32 %v953, %v900
        %v957 = vadd.f32 %v955, %v901
        %v958 = vsub.f32 %v956, %v902
        %v959 = vsub.f32 %v957, %v903
        %vm960 = vcmp.ne.s32.totalorder %v464, 255
        %vm961 = vcmp.ne.s32.totalorder %v465, 255
        %v962 = vstv %s466
        %vm963 = vcmp.ge.f32.partialorder %v958, %v962
        %vm964 = vcmp.ge.f32.partialorder %v959, %v962
        %vm965 = vmand %vm960, %vm963
        %vm966 = vmand %vm961, %vm964
        %v967 = vld [vmem:[#allocation4] sm:$0xff]
        %v968 = vld [vmem:[#allocation4 + $0x8] sm:$0xff]
        %v969 = vsel %vm965, %v958, 0.0
        %v970 = vsel %vm966, %v959, 0.0
        %v971 = vadd.f32 %v967, %v969
        %v972 = vadd.f32 %v968, %v970
        %973 = vst [vmem:[#allocation4] sm:$0xff] %v971
        %974 = vst [vmem:[#allocation4 + $0x8] sm:$0xff] %v972
        %v975 = vld [vmem:[#allocation5] sm:$0xff]
        %v976 = vld [vmem:[#allocation5 + $0x8] sm:$0xff]
        %v977 = vsel %vm965, 1, 0
        %v978 = vsel %vm966, 1, 0
        %v979 = vcvt.s32.f32 %v977
        %v980 = vcvt.s32.f32 %v978
        %v981 = vadd.f32 %v975, %v979
        %v982 = vadd.f32 %v976, %v980
        %983 = vst [vmem:[#allocation5] sm:$0xff] %v981
        %984 = vst [vmem:[#allocation5 + $0x8] sm:$0xff] %v982
        // Predicated region
        $region61: #{criterion_ohem_cross_entropy.3} parent=39 // pred_check
          %p985 = pneg %p337
        $region62: #{criterion_ohem_cross_entropy.3} parent=39 // pred_check_branch
          %987 = sbr.rel (%p985) target = $region64
        $region63: #{criterion_ohem_cross_entropy.3} parent=39 // pred_region
          %v988 = vld [vmem:[#allocation4] sm:$0xff]
          %v989 = vld [vmem:[#allocation4 + $0x8] sm:$0xff]
          %v990 = vadd.f32 %v988, %v989
          %991 = vadd.xlane.f32.xlu0 %v990
          %v992 = vpop.xlane.xlu0 %991
          %v993 = vrot.slane %v992, 4
          %v994 = vadd.f32 %v992, %v993
          %v995 = vrot.slane %v994, 2
          %v996 = vadd.f32 %v994, %v995
          %v997 = vrot.slane %v996, 1
          %v998 = vadd.f32 %v996, %v997
          %s999 = vtos %v998
          %v1000 = vld [vmem:[#allocation5] sm:$0xff]
          %v1001 = vld [vmem:[#allocation5 + $0x8] sm:$0xff]
          %v1002 = vadd.f32 %v1000, %v1001
          %1003 = vadd.xlane.f32.xlu0 %v1002
          %v1004 = vpop.xlane.xlu0 %1003
          %v1005 = vrot.slane %v1004, 4
          %v1006 = vadd.f32 %v1004, %v1005
          %v1007 = vrot.slane %v1006, 2
          %v1008 = vadd.f32 %v1006, %v1007
          %v1009 = vrot.slane %v1008, 1
          %v1010 = vadd.f32 %v1008, %v1009
          %s1011 = vtos %v1010
          %v1012 = vlaneseq
          %v1013 = vshrl.u32 %v1012, 7
          %v1014 = vlaneseq
          %v1015 = vand.u32 %v1014, 127
          %vm1016 = vcmp.eq.s32.totalorder %v1013, 0
          %vm1017 = vcmp.eq.s32.totalorder %v1015, 0
          %vm1018 = vmand %vm1016, %vm1017
          %v1019 = vstv %s999
          %v1020 = vsel %vm1018, %v1019, 0.0
          %vm1021 = vcmp.eq.s32.totalorder %v1015, 1
          %vm1022 = vmand %vm1016, %vm1021
          %v1023 = vstv %s1011
          %v1024 = vsel %vm1022, %v1023, %v1020
          %1025 = vst [vmem:[%s334] sm:$0xff] %v1024
        $region64: #{criterion_ohem_cross_entropy.3} parent=39 // pred_fallthru
          _
        %s1026 = sand.u32 %s169, 1
        %s1027 = scalar_lea.sflag [#allocation9], %s1026
        %s1028 = sand.u32 %s169, 1
        %s1029 = smul.addr %s1028, 8
        %s1030 = scalar_lea.vmem [#allocation15], %s1029
        // Predicated region
        $region65: #{criterion_ohem_cross_entropy.3} parent=39 // pred_check
          %p1031 = pneg %p179
        $region66: #{criterion_ohem_cross_entropy.3} parent=39 // pred_check_branch
          %1033 = sbr.rel (%p1031) target = $region68
        $region67: #{criterion_ohem_cross_entropy.3} parent=39 // pred_region
          %s1035 = ssub.s32 128, 128
          %1036 = vsyncadd %s1027, %s1035
          %s1037 = smul.addr %s31, 128
          %s1038 = scalar_lea.hbm %s5, %s1037
          %s1040 = sshll.u32 %s1030, 4
          %s1041 = int_to_ptr.vmem [resolvable:$true] %s1040
          %1043 = dma.vmem_to_hbm [thread:$0]  %s1041, 128, %s1038, %s1027
        $region68: #{criterion_ohem_cross_entropy.3} parent=39 // pred_fallthru
          _
      $region40: #{criterion_ohem_cross_entropy.3} parent=5 // pred_fallthru
        _
      %p1044 = scmp.le.s32.totalorder 2, %s22
      // Predicated region
      $region69: #{criterion_ohem_cross_entropy.3} parent=5 // pred_check
        %p1045 = pneg %p1044
      $region70: #{criterion_ohem_cross_entropy.3} parent=5 // pred_check_branch
        %1047 = sbr.rel (%p1045) target = $region72
      $region71: #{criterion_ohem_cross_entropy.3} parent=5 // pred_region
        %s1048 = ssub.s32 %s22, 2
        // Predicated region
        $region73: #{criterion_ohem_cross_entropy.3} parent=71 // pred_check
          %p1049 = pneg %p185
        $region74: #{criterion_ohem_cross_entropy.3} parent=71 // pred_check_branch
          %1051 = sbr.rel (%p1049) target = $region76
        $region75: #{criterion_ohem_cross_entropy.3} parent=71 // pred_region
          %s1052 = sand.u32 %s170, 1
          %s1053 = scalar_lea.sflag [#allocation9], %s1052
          %s1054 = sand.u32 %s170, 1
          %s1055 = smul.addr %s1054, 8
          %s1056 = scalar_lea.vmem [#allocation15], %s1055
          %1057 = dma.done %s1053, 128
        $region76: #{criterion_ohem_cross_entropy.3} parent=71 // pred_fallthru
          _
      $region72: #{criterion_ohem_cross_entropy.3} parent=5 // pred_fallthru
        _
    $region6: #{criterion_ohem_cross_entropy.3} parent=1 // loop_footer
      %s26 = sadd.s32 1, %s22
    $region7: #{criterion_ohem_cross_entropy.3} parent=1 // loop_footer_branch
      %21 = sbr.rel target = $region3
    $region8: #{criterion_ohem_cross_entropy.3} parent=1 // loop_exit
      _
    %1058 = vsyncpa [#allocation8], 1
    %s1059 = scalar_lea.sflag [#allocation8], 1
    %1060 = vsyncpa %s1059, 1
    %1061 = vsyncpa [#allocation11], 1
    %s1062 = scalar_lea.sflag [#allocation11], 1
    %1063 = vsyncpa %s1062, 1
    %1064 = vsyncpa [#allocation14], 1
    %s1065 = scalar_lea.sflag [#allocation14], 1
    %1066 = vsyncpa %s1065, 1
    %1067 = vsyncpa [#allocation9], 1
    %s1068 = scalar_lea.sflag [#allocation9], 1
    %1069 = vsyncpa %s1068, 1

</llo_original>
